<compile_context>
chip_gen: v5e
topology: v5e:2x2
jax: 0.10.0
libtpu: 0.0.40
codegen_flags: <defaults>
</compile_context>

<pallas_src>
import jax
import jax.numpy as jnp
from jax.experimental import pallas as pl
from jax.experimental.pallas import tpu as pltpu


_MAX_TILE_M = 512   # conv row tiling (multiple of 8 and of 256 for MXU fill)
_MAX_TILE_B = 256   # fc batch-row tiling
_VMEM_LIMIT = 32 * 1024 * 1024


# ----------------------------- Pallas kernels ------------------------------

def _conv_sigmoid_pool_kernel(p0_ref, p1_ref, p2_ref, p3_ref, w_ref, b_ref,
                              o_ref):
    """Fused Conv2d (as im2col matmul) + MaxPool2d(2,2) + Sigmoid.

    p{q}_ref holds the im2col patches of pool-window corner q (stride-2
    positions).  max(sigmoid(s_q + b)) == sigmoid(max(s_q) + b), so we max the
    raw matmul results and apply bias + sigmoid once.
    """
    w = w_ref[...]
    s = jnp.dot(p0_ref[...], w, preferred_element_type=jnp.float32)
    s = jnp.maximum(s, jnp.dot(p1_ref[...], w, preferred_element_type=jnp.float32))
    s = jnp.maximum(s, jnp.dot(p2_ref[...], w, preferred_element_type=jnp.float32))
    s = jnp.maximum(s, jnp.dot(p3_ref[...], w, preferred_element_type=jnp.float32))
    o_ref[...] = jax.nn.sigmoid(s + b_ref[...]).astype(o_ref.dtype)


def _fc_stack_kernel(x_ref, w1_ref, b1_ref, w2_ref, b2_ref, w3_ref, b3_ref,
                     o_ref):
    """Fused Linear+Sigmoid -> Linear+Sigmoid -> Linear."""
    h = jnp.dot(x_ref[...], w1_ref[...], preferred_element_type=jnp.float32)
    h = jax.nn.sigmoid(h + b1_ref[...])
    h = jnp.dot(h, w2_ref[...], preferred_element_type=jnp.float32)
    h = jax.nn.sigmoid(h + b2_ref[...])
    out = jnp.dot(h, w3_ref[...], preferred_element_type=jnp.float32) + b3_ref[...]
    o_ref[...] = out.astype(o_ref.dtype)


# ------------------------------ wrappers ------------------------------------

def conv_sigmoid_pool(x_nhwc, w_kc, b_1c, *, kh, kw):
    """Conv2d(valid, stride 1) + Sigmoid + MaxPool2d(2,2), one Pallas call.

    x_nhwc : (B, H, W, C_in) f32
    w_kc   : (C_in*kh*kw, C_out) f32   (pre-transposed, (C_in, kh, kw)-ordered K)
    b_1c   : (1, C_out) f32
    returns: (B, (H-kh+1)//2, (W-kw+1)//2, C_out) f32
    """
    B, H, W, C_in = x_nhwc.shape
    K, C_out = w_kc.shape
    OH, OW = H - kh + 1, W - kw + 1
    POH, POW = OH // 2, OW // 2
    M = B * POH * POW

    # One stride-2 patch extraction per pool-window corner (4 XLA ops total).
    # Feature ordering of conv_general_dilated_patches is (C_in, kh, kw),
    # matching the PyTorch weight reshape.
    corners = []
    for di in (0, 1):
        for dj in (0, 1):
            p = jax.lax.conv_general_dilated_patches(
                x_nhwc[:, di:, dj:, :],
                filter_shape=(kh, kw),
                window_strides=(2, 2),
                padding="VALID",
                dimension_numbers=("NHWC", "HWIO", "NHWC"),
            )
            corners.append(p.reshape(M, K))

    tile_m = M if M <= _MAX_TILE_M else _MAX_TILE_M
    grid = (pl.cdiv(M, tile_m),)
    cost = pl.CostEstimate(
        flops=2 * 4 * M * K * C_out + 4 * M * C_out,
        transcendentals=M * C_out,
        bytes_accessed=4 * (4 * M * K + K * C_out + C_out + M * C_out),
    )
    out = pl.pallas_call(
        _conv_sigmoid_pool_kernel,
        out_shape=jax.ShapeDtypeStruct((M, C_out), jnp.float32),
        grid=grid,
        in_specs=[pl.BlockSpec((tile_m, K), lambda i: (i, 0)) for _ in range(4)]
        + [
            pl.BlockSpec((K, C_out), lambda i: (0, 0)),
            pl.BlockSpec((1, C_out), lambda i: (0, 0)),
        ],
        out_specs=pl.BlockSpec((tile_m, C_out), lambda i: (i, 0)),
        compiler_params=pltpu.CompilerParams(
            dimension_semantics=("parallel",),
            vmem_limit_bytes=_VMEM_LIMIT,
        ),
        cost_estimate=cost,
    )(*corners, w_kc, b_1c)
    return out.reshape(B, POH, POW, C_out)


def fc_stack(x, w1, b1, w2, b2, w3, b3):
    """Fused 3-layer MLP head.  x: (B, 256) f32 -> (B, 10) f32."""
    B, K1 = x.shape
    N1, N2, N3 = w1.shape[1], w2.shape[1], w3.shape[1]
    tile_b = B if B <= _MAX_TILE_B else _MAX_TILE_B
    grid = (pl.cdiv(B, tile_b),)
    cost = pl.CostEstimate(
        flops=2 * B * (K1 * N1 + N1 * N2 + N2 * N3),
        transcendentals=B * (N1 + N2),
        bytes_accessed=4 * (B * K1 + K1 * N1 + N1 * N2 + N2 * N3
                            + N1 + N2 + N3 + B * N3),
    )
    return pl.pallas_call(
        _fc_stack_kernel,
        out_shape=jax.ShapeDtypeStruct((B, N3), jnp.float32),
        grid=grid,
        in_specs=[
            pl.BlockSpec((tile_b, K1), lambda i: (i, 0)),
            pl.BlockSpec((K1, N1), lambda i: (0, 0)),
            pl.BlockSpec((1, N1), lambda i: (0, 0)),
            pl.BlockSpec((N1, N2), lambda i: (0, 0)),
            pl.BlockSpec((1, N2), lambda i: (0, 0)),
            pl.BlockSpec((N2, N3), lambda i: (0, 0)),
            pl.BlockSpec((1, N3), lambda i: (0, 0)),
        ],
        out_specs=pl.BlockSpec((tile_b, N3), lambda i: (i, 0)),
        compiler_params=pltpu.CompilerParams(
            dimension_semantics=("parallel",),
            vmem_limit_bytes=_VMEM_LIMIT,
        ),
        cost_estimate=cost,
    )(x, w1, b1, w2, b2, w3, b3)


# ------------------------------- parameters ---------------------------------

def init_lenet_params(key):
    """Deterministic synthetic init in PyTorch layout (+-1/sqrt(fan_in))."""
    def uinit(k, shape, fan_in):
        bound = 1.0 / (fan_in ** 0.5)
        return jax.random.uniform(k, shape, jnp.float32, -bound, bound)

    ks = jax.random.split(key, 10)
    return {
        "conv1_w": uinit(ks[0], (6, 1, 5, 5), 1 * 5 * 5),
        "conv1_b": uinit(ks[1], (6,), 1 * 5 * 5),
        "conv2_w": uinit(ks[2], (16, 6, 5, 5), 6 * 5 * 5),
        "conv2_b": uinit(ks[3], (16,), 6 * 5 * 5),
        "fc1_w": uinit(ks[4], (120, 256), 256),
        "fc1_b": uinit(ks[5], (120,), 256),
        "fc2_w": uinit(ks[6], (84, 120), 120),
        "fc2_b": uinit(ks[7], (84,), 120),
        "fc3_w": uinit(ks[8], (10, 84), 84),
        "fc3_b": uinit(ks[9], (10,), 84),
    }


def prepare_params(p):
    """One-time hoist of all weight transposes / permutations out of forward.

    fc1's K axis is permuted from PyTorch's NCHW flatten order (C,H,W) to the
    NHWC order (H,W,C) that our conv2 output naturally flattens to, so the
    forward needs no feature-map transpose before the FC stack.
    """
    fc1 = p["fc1_w"].reshape(120, 16, 4, 4)                      # K axis = (C,H,W)
    fc1 = jnp.transpose(fc1, (0, 2, 3, 1)).reshape(120, 256)     # K axis = (H,W,C)
    return {
        "conv1_w": p["conv1_w"].reshape(6, 1 * 5 * 5).T,         # (25, 6)
        "conv1_b": p["conv1_b"].reshape(1, 6),
        "conv2_w": p["conv2_w"].reshape(16, 6 * 5 * 5).T,        # (150, 16)
        "conv2_b": p["conv2_b"].reshape(1, 16),
        "fc1_w": fc1.T,                                          # (256, 120)
        "fc1_b": p["fc1_b"].reshape(1, 120),
        "fc2_w": p["fc2_w"].T,                                   # (120, 84)
        "fc2_b": p["fc2_b"].reshape(1, 84),
        "fc3_w": p["fc3_w"].T,                                   # (84, 10)
        "fc3_b": p["fc3_b"].reshape(1, 10),
    }


# ------------------------------- forward ------------------------------------

@jax.jit
def lenet_forward(prepared, img_nchw):
    """img_nchw: (B, 1, 28, 28) f32 -> logits (B, 10) f32."""
    B = img_nchw.shape[0]
    x = jnp.transpose(img_nchw, (0, 2, 3, 1))                           # NHWC
    x = conv_sigmoid_pool(x, prepared["conv1_w"], prepared["conv1_b"],
                          kh=5, kw=5)                                   # (B,12,12, 6)
    x = conv_sigmoid_pool(x, prepared["conv2_w"], prepared["conv2_b"],
                          kh=5, kw=5)                                   # (B, 4, 4,16)
    # NHWC flatten; the matching (C,H,W)->(H,W,C) permutation was folded into
    # fc1_w at prepare_params() time, so this is a plain reshape.
    feat = x.reshape(B, 4 * 4 * 16)                                     # (B, 256)
    return fc_stack(feat,
                    prepared["fc1_w"], prepared["fc1_b"],
                    prepared["fc2_w"], prepared["fc2_b"],
                    prepared["fc3_w"], prepared["fc3_b"])


if __name__ == "__main__":
    key = jax.random.PRNGKey(0)
    pkey, xkey = jax.random.split(key)
    params = prepare_params(init_lenet_params(pkey))
    # The FC stack requires 16*4*4 features, which pins the input to 28x28, 1 ch.
    img = jax.random.normal(xkey, (2, 1, 28, 28), jnp.float32)
    out = jax.block_until_ready(lenet_forward(params, img))
    assert out.shape == (2, 10) and out.dtype == jnp.float32
    print("KERNEL_OK")
</pallas_src>

<mosaic_0001>
module attributes {stable_mosaic.version = 11 : i64} {
  func.func @_conv_sigmoid_pool_kernel(%arg0: i32, %arg1: memref<288x25xf32, #tpu.memory_space<vmem>>, %arg2: memref<288x25xf32, #tpu.memory_space<vmem>>, %arg3: memref<288x25xf32, #tpu.memory_space<vmem>>, %arg4: memref<288x25xf32, #tpu.memory_space<vmem>>, %arg5: memref<25x6xf32, #tpu.memory_space<vmem>>, %arg6: memref<1x6xf32, #tpu.memory_space<vmem>>, %arg7: memref<288x6xf32, #tpu.memory_space<vmem>>) attributes {dimension_semantics = [#tpu.dimension_semantics<parallel>], iteration_bounds = array<i64: 1>, scalar_prefetch = 0 : i64, scratch_operands = 0 : i64, tpu.core_type = #tpu.core_type<tc>, window_params = [{transform_indices = @transform_0, window_bounds = array<i64: 288, 25>}, {transform_indices = @transform_1, window_bounds = array<i64: 288, 25>}, {transform_indices = @transform_2, window_bounds = array<i64: 288, 25>}, {transform_indices = @transform_3, window_bounds = array<i64: 288, 25>}, {pipeline_mode = #tpu.pipeline_mode<synchronous>, transform_indices = @transform_4, window_bounds = array<i64: 25, 6>}, {pipeline_mode = #tpu.pipeline_mode<synchronous>, transform_indices = @transform_5, window_bounds = array<i64: 1, 6>}, {transform_indices = @transform_6, window_bounds = array<i64: 288, 6>}]} {
    %c0 = arith.constant 0 : index
    %c0_0 = arith.constant 0 : index
    %0 = vector.load %arg5[%c0, %c0_0] : memref<25x6xf32, #tpu.memory_space<vmem>>, vector<25x6xf32>
    %c0_1 = arith.constant 0 : index
    %c0_2 = arith.constant 0 : index
    %1 = vector.load %arg1[%c0_1, %c0_2] : memref<288x25xf32, #tpu.memory_space<vmem>>, vector<288x25xf32>
    %cst = arith.constant dense<0.000000e+00> : vector<288x6xf32>
    %2 = tpu.matmul %1, %0, %cst {dimension_numbers = #tpu.dot_dimension_numbers<[1], [0], [0], [1], [0, 0, 1, 1], [], []>} : vector<288x25xf32>, vector<25x6xf32>, vector<288x6xf32> -> vector<288x6xf32>
    %c0_3 = arith.constant 0 : index
    %c0_4 = arith.constant 0 : index
    %3 = vector.load %arg2[%c0_3, %c0_4] : memref<288x25xf32, #tpu.memory_space<vmem>>, vector<288x25xf32>
    %cst_5 = arith.constant dense<0.000000e+00> : vector<288x6xf32>
    %4 = tpu.matmul %3, %0, %cst_5 {dimension_numbers = #tpu.dot_dimension_numbers<[1], [0], [0], [1], [0, 0, 1, 1], [], []>} : vector<288x25xf32>, vector<25x6xf32>, vector<288x6xf32> -> vector<288x6xf32>
    %5 = arith.maximumf %2, %4 : vector<288x6xf32>
    %c0_6 = arith.constant 0 : index
    %c0_7 = arith.constant 0 : index
    %6 = vector.load %arg3[%c0_6, %c0_7] : memref<288x25xf32, #tpu.memory_space<vmem>>, vector<288x25xf32>
    %cst_8 = arith.constant dense<0.000000e+00> : vector<288x6xf32>
    %7 = tpu.matmul %6, %0, %cst_8 {dimension_numbers = #tpu.dot_dimension_numbers<[1], [0], [0], [1], [0, 0, 1, 1], [], []>} : vector<288x25xf32>, vector<25x6xf32>, vector<288x6xf32> -> vector<288x6xf32>
    %8 = arith.maximumf %5, %7 : vector<288x6xf32>
    %c0_9 = arith.constant 0 : index
    %c0_10 = arith.constant 0 : index
    %9 = vector.load %arg4[%c0_9, %c0_10] : memref<288x25xf32, #tpu.memory_space<vmem>>, vector<288x25xf32>
    %cst_11 = arith.constant dense<0.000000e+00> : vector<288x6xf32>
    %10 = tpu.matmul %9, %0, %cst_11 {dimension_numbers = #tpu.dot_dimension_numbers<[1], [0], [0], [1], [0, 0, 1, 1], [], []>} : vector<288x25xf32>, vector<25x6xf32>, vector<288x6xf32> -> vector<288x6xf32>
    %11 = arith.maximumf %8, %10 : vector<288x6xf32>
    %c0_12 = arith.constant 0 : index
    %c0_13 = arith.constant 0 : index
    %12 = vector.load %arg6[%c0_12, %c0_13] : memref<1x6xf32, #tpu.memory_space<vmem>>, vector<1x6xf32>
    %13 = vector.broadcast %12 : vector<1x6xf32> to vector<288x6xf32>
    %14 = arith.addf %11, %13 : vector<288x6xf32>
    %15 = arith.negf %14 : vector<288x6xf32>
    %16 = math.exp %15 : vector<288x6xf32>
    %cst_14 = arith.constant 1.000000e+00 : f32
    %17 = vector.broadcast %cst_14 : f32 to vector<288x6xf32>
    %18 = arith.addf %17, %16 : vector<288x6xf32>
    %19 = arith.divf %17, %18 : vector<288x6xf32>
    %c0_15 = arith.constant 0 : index
    %c0_16 = arith.constant 0 : index
    %20 = vector.load %arg7[%c0_15, %c0_16] : memref<288x6xf32, #tpu.memory_space<vmem>>, vector<288x6xf32>
    tpu.vector_store %arg7[%c0_15, %c0_16], %19 {strides = array<i32>} : memref<288x6xf32, #tpu.memory_space<vmem>>, vector<288x6xf32>,
    return
  }
  func.func @transform_0(%arg0: i32) -> (i32, i32) {
    %c0_i32 = arith.constant 0 : i32
    %c0_i32_0 = arith.constant 0 : i32
    return %arg0, %c0_i32 : i32, i32
  }
  func.func @transform_1(%arg0: i32) -> (i32, i32) {
    %c0_i32 = arith.constant 0 : i32
    %c0_i32_0 = arith.constant 0 : i32
    return %arg0, %c0_i32 : i32, i32
  }
  func.func @transform_2(%arg0: i32) -> (i32, i32) {
    %c0_i32 = arith.constant 0 : i32
    %c0_i32_0 = arith.constant 0 : i32
    return %arg0, %c0_i32 : i32, i32
  }
  func.func @transform_3(%arg0: i32) -> (i32, i32) {
    %c0_i32 = arith.constant 0 : i32
    %c0_i32_0 = arith.constant 0 : i32
    return %arg0, %c0_i32 : i32, i32
  }
  func.func @transform_4(%arg0: i32) -> (i32, i32) {
    %c0_i32 = arith.constant 0 : i32
    %c0_i32_0 = arith.constant 0 : i32
    %c0_i32_1 = arith.constant 0 : i32
    return %c0_i32, %c0_i32_0 : i32, i32
  }
  func.func @transform_5(%arg0: i32) -> (i32, i32) {
    %c0_i32 = arith.constant 0 : i32
    %c0_i32_0 = arith.constant 0 : i32
    %c0_i32_1 = arith.constant 0 : i32
    return %c0_i32, %c0_i32_0 : i32, i32
  }
  func.func @transform_6(%arg0: i32) -> (i32, i32) {
    %c0_i32 = arith.constant 0 : i32
    %c0_i32_0 = arith.constant 0 : i32
    return %arg0, %c0_i32 : i32, i32
  }
}

module attributes {stable_mosaic.version = 11 : i64} {
  func.func @_conv_sigmoid_pool_kernel(%arg0: i32, %arg1: memref<32x150xf32, #tpu.memory_space<vmem>>, %arg2: memref<32x150xf32, #tpu.memory_space<vmem>>, %arg3: memref<32x150xf32, #tpu.memory_space<vmem>>, %arg4: memref<32x150xf32, #tpu.memory_space<vmem>>, %arg5: memref<150x16xf32, #tpu.memory_space<vmem>>, %arg6: memref<1x16xf32, #tpu.memory_space<vmem>>, %arg7: memref<32x16xf32, #tpu.memory_space<vmem>>) attributes {dimension_semantics = [#tpu.dimension_semantics<parallel>], iteration_bounds = array<i64: 1>, scalar_prefetch = 0 : i64, scratch_operands = 0 : i64, tpu.core_type = #tpu.core_type<tc>, window_params = [{transform_indices = @transform_0, window_bounds = array<i64: 32, 150>}, {transform_indices = @transform_1, window_bounds = array<i64: 32, 150>}, {transform_indices = @transform_2, window_bounds = array<i64: 32, 150>}, {transform_indices = @transform_3, window_bounds = array<i64: 32, 150>}, {pipeline_mode = #tpu.pipeline_mode<synchronous>, transform_indices = @transform_4, window_bounds = array<i64: 150, 16>}, {pipeline_mode = #tpu.pipeline_mode<synchronous>, transform_indices = @transform_5, window_bounds = array<i64: 1, 16>}, {transform_indices = @transform_6, window_bounds = array<i64: 32, 16>}]} {
    %c0 = arith.constant 0 : index
    %c0_0 = arith.constant 0 : index
    %0 = vector.load %arg5[%c0, %c0_0] : memref<150x16xf32, #tpu.memory_space<vmem>>, vector<150x16xf32>
    %c0_1 = arith.constant 0 : index
    %c0_2 = arith.constant 0 : index
    %1 = vector.load %arg1[%c0_1, %c0_2] : memref<32x150xf32, #tpu.memory_space<vmem>>, vector<32x150xf32>
    %cst = arith.constant dense<0.000000e+00> : vector<32x16xf32>
    %2 = tpu.matmul %1, %0, %cst {dimension_numbers = #tpu.dot_dimension_numbers<[1], [0], [0], [1], [0, 0, 1, 1], [], []>} : vector<32x150xf32>, vector<150x16xf32>, vector<32x16xf32> -> vector<32x16xf32>
    %c0_3 = arith.constant 0 : index
    %c0_4 = arith.constant 0 : index
    %3 = vector.load %arg2[%c0_3, %c0_4] : memref<32x150xf32, #tpu.memory_space<vmem>>, vector<32x150xf32>
    %cst_5 = arith.constant dense<0.000000e+00> : vector<32x16xf32>
    %4 = tpu.matmul %3, %0, %cst_5 {dimension_numbers = #tpu.dot_dimension_numbers<[1], [0], [0], [1], [0, 0, 1, 1], [], []>} : vector<32x150xf32>, vector<150x16xf32>, vector<32x16xf32> -> vector<32x16xf32>
    %5 = arith.maximumf %2, %4 : vector<32x16xf32>
    %c0_6 = arith.constant 0 : index
    %c0_7 = arith.constant 0 : index
    %6 = vector.load %arg3[%c0_6, %c0_7] : memref<32x150xf32, #tpu.memory_space<vmem>>, vector<32x150xf32>
    %cst_8 = arith.constant dense<0.000000e+00> : vector<32x16xf32>
    %7 = tpu.matmul %6, %0, %cst_8 {dimension_numbers = #tpu.dot_dimension_numbers<[1], [0], [0], [1], [0, 0, 1, 1], [], []>} : vector<32x150xf32>, vector<150x16xf32>, vector<32x16xf32> -> vector<32x16xf32>
    %8 = arith.maximumf %5, %7 : vector<32x16xf32>
    %c0_9 = arith.constant 0 : index
    %c0_10 = arith.constant 0 : index
    %9 = vector.load %arg4[%c0_9, %c0_10] : memref<32x150xf32, #tpu.memory_space<vmem>>, vector<32x150xf32>
    %cst_11 = arith.constant dense<0.000000e+00> : vector<32x16xf32>
    %10 = tpu.matmul %9, %0, %cst_11 {dimension_numbers = #tpu.dot_dimension_numbers<[1], [0], [0], [1], [0, 0, 1, 1], [], []>} : vector<32x150xf32>, vector<150x16xf32>, vector<32x16xf32> -> vector<32x16xf32>
    %11 = arith.maximumf %8, %10 : vector<32x16xf32>
    %c0_12 = arith.constant 0 : index
    %c0_13 = arith.constant 0 : index
    %12 = vector.load %arg6[%c0_12, %c0_13] : memref<1x16xf32, #tpu.memory_space<vmem>>, vector<1x16xf32>
    %13 = vector.broadcast %12 : vector<1x16xf32> to vector<32x16xf32>
    %14 = arith.addf %11, %13 : vector<32x16xf32>
    %15 = arith.negf %14 : vector<32x16xf32>
    %16 = math.exp %15 : vector<32x16xf32>
    %cst_14 = arith.constant 1.000000e+00 : f32
    %17 = vector.broadcast %cst_14 : f32 to vector<32x16xf32>
    %18 = arith.addf %17, %16 : vector<32x16xf32>
    %19 = arith.divf %17, %18 : vector<32x16xf32>
    %c0_15 = arith.constant 0 : index
    %c0_16 = arith.constant 0 : index
    %20 = vector.load %arg7[%c0_15, %c0_16] : memref<32x16xf32, #tpu.memory_space<vmem>>, vector<32x16xf32>
    tpu.vector_store %arg7[%c0_15, %c0_16], %19 {strides = array<i32>} : memref<32x16xf32, #tpu.memory_space<vmem>>, vector<32x16xf32>,
    return
  }
  func.func @transform_0(%arg0: i32) -> (i32, i32) {
    %c0_i32 = arith.constant 0 : i32
    %c0_i32_0 = arith.constant 0 : i32
    return %arg0, %c0_i32 : i32, i32
  }
  func.func @transform_1(%arg0: i32) -> (i32, i32) {
    %c0_i32 = arith.constant 0 : i32
    %c0_i32_0 = arith.constant 0 : i32
    return %arg0, %c0_i32 : i32, i32
  }
  func.func @transform_2(%arg0: i32) -> (i32, i32) {
    %c0_i32 = arith.constant 0 : i32
    %c0_i32_0 = arith.constant 0 : i32
    return %arg0, %c0_i32 : i32, i32
  }
  func.func @transform_3(%arg0: i32) -> (i32, i32) {
    %c0_i32 = arith.constant 0 : i32
    %c0_i32_0 = arith.constant 0 : i32
    return %arg0, %c0_i32 : i32, i32
  }
  func.func @transform_4(%arg0: i32) -> (i32, i32) {
    %c0_i32 = arith.constant 0 : i32
    %c0_i32_0 = arith.constant 0 : i32
    %c0_i32_1 = arith.constant 0 : i32
    return %c0_i32, %c0_i32_0 : i32, i32
  }
  func.func @transform_5(%arg0: i32) -> (i32, i32) {
    %c0_i32 = arith.constant 0 : i32
    %c0_i32_0 = arith.constant 0 : i32
    %c0_i32_1 = arith.constant 0 : i32
    return %c0_i32, %c0_i32_0 : i32, i32
  }
  func.func @transform_6(%arg0: i32) -> (i32, i32) {
    %c0_i32 = arith.constant 0 : i32
    %c0_i32_0 = arith.constant 0 : i32
    return %arg0, %c0_i32 : i32, i32
  }
}

module attributes {stable_mosaic.version = 11 : i64} {
  func.func @_fc_stack_kernel(%arg0: i32, %arg1: memref<2x256xf32, #tpu.memory_space<vmem>>, %arg2: memref<256x120xf32, #tpu.memory_space<vmem>>, %arg3: memref<1x120xf32, #tpu.memory_space<vmem>>, %arg4: memref<120x84xf32, #tpu.memory_space<vmem>>, %arg5: memref<1x84xf32, #tpu.memory_space<vmem>>, %arg6: memref<84x10xf32, #tpu.memory_space<vmem>>, %arg7: memref<1x10xf32, #tpu.memory_space<vmem>>, %arg8: memref<2x10xf32, #tpu.memory_space<vmem>>) attributes {dimension_semantics = [#tpu.dimension_semantics<parallel>], iteration_bounds = array<i64: 1>, scalar_prefetch = 0 : i64, scratch_operands = 0 : i64, tpu.core_type = #tpu.core_type<tc>, window_params = [{transform_indices = @transform_0, window_bounds = array<i64: 2, 256>}, {pipeline_mode = #tpu.pipeline_mode<synchronous>, transform_indices = @transform_1, window_bounds = array<i64: 256, 120>}, {pipeline_mode = #tpu.pipeline_mode<synchronous>, transform_indices = @transform_2, window_bounds = array<i64: 1, 120>}, {pipeline_mode = #tpu.pipeline_mode<synchronous>, transform_indices = @transform_3, window_bounds = array<i64: 120, 84>}, {pipeline_mode = #tpu.pipeline_mode<synchronous>, transform_indices = @transform_4, window_bounds = array<i64: 1, 84>}, {pipeline_mode = #tpu.pipeline_mode<synchronous>, transform_indices = @transform_5, window_bounds = array<i64: 84, 10>}, {pipeline_mode = #tpu.pipeline_mode<synchronous>, transform_indices = @transform_6, window_bounds = array<i64: 1, 10>}, {transform_indices = @transform_7, window_bounds = array<i64: 2, 10>}]} {
    %c0 = arith.constant 0 : index
    %c0_0 = arith.constant 0 : index
    %0 = vector.load %arg1[%c0, %c0_0] : memref<2x256xf32, #tpu.memory_space<vmem>>, vector<2x256xf32>
    %c0_1 = arith.constant 0 : index
    %c0_2 = arith.constant 0 : index
    %1 = vector.load %arg2[%c0_1, %c0_2] : memref<256x120xf32, #tpu.memory_space<vmem>>, vector<256x120xf32>
    %cst = arith.constant dense<0.000000e+00> : vector<2x120xf32>
    %2 = tpu.matmul %0, %1, %cst {dimension_numbers = #tpu.dot_dimension_numbers<[1], [0], [0], [1], [0, 0, 1, 1], [], []>} : vector<2x256xf32>, vector<256x120xf32>, vector<2x120xf32> -> vector<2x120xf32>
    %c0_3 = arith.constant 0 : index
    %c0_4 = arith.constant 0 : index
    %3 = vector.load %arg3[%c0_3, %c0_4] : memref<1x120xf32, #tpu.memory_space<vmem>>, vector<1x120xf32>
    %4 = vector.broadcast %3 : vector<1x120xf32> to vector<2x120xf32>
    %5 = arith.addf %2, %4 : vector<2x120xf32>
    %6 = arith.negf %5 : vector<2x120xf32>
    %7 = math.exp %6 : vector<2x120xf32>
    %cst_5 = arith.constant 1.000000e+00 : f32
    %8 = vector.broadcast %cst_5 : f32 to vector<2x120xf32>
    %9 = arith.addf %8, %7 : vector<2x120xf32>
    %10 = arith.divf %8, %9 : vector<2x120xf32>
    %c0_6 = arith.constant 0 : index
    %c0_7 = arith.constant 0 : index
    %11 = vector.load %arg4[%c0_6, %c0_7] : memref<120x84xf32, #tpu.memory_space<vmem>>, vector<120x84xf32>
    %cst_8 = arith.constant dense<0.000000e+00> : vector<2x84xf32>
    %12 = tpu.matmul %10, %11, %cst_8 {dimension_numbers = #tpu.dot_dimension_numbers<[1], [0], [0], [1], [0, 0, 1, 1], [], []>} : vector<2x120xf32>, vector<120x84xf32>, vector<2x84xf32> -> vector<2x84xf32>
    %c0_9 = arith.constant 0 : index
    %c0_10 = arith.constant 0 : index
    %13 = vector.load %arg5[%c0_9, %c0_10] : memref<1x84xf32, #tpu.memory_space<vmem>>, vector<1x84xf32>
    %14 = vector.broadcast %13 : vector<1x84xf32> to vector<2x84xf32>
    %15 = arith.addf %12, %14 : vector<2x84xf32>
    %16 = arith.negf %15 : vector<2x84xf32>
    %17 = math.exp %16 : vector<2x84xf32>
    %cst_11 = arith.constant 1.000000e+00 : f32
    %18 = vector.broadcast %cst_11 : f32 to vector<2x84xf32>
    %19 = arith.addf %18, %17 : vector<2x84xf32>
    %20 = arith.divf %18, %19 : vector<2x84xf32>
    %c0_12 = arith.constant 0 : index
    %c0_13 = arith.constant 0 : index
    %21 = vector.load %arg6[%c0_12, %c0_13] : memref<84x10xf32, #tpu.memory_space<vmem>>, vector<84x10xf32>
    %cst_14 = arith.constant dense<0.000000e+00> : vector<2x10xf32>
    %22 = tpu.matmul %20, %21, %cst_14 {dimension_numbers = #tpu.dot_dimension_numbers<[1], [0], [0], [1], [0, 0, 1, 1], [], []>} : vector<2x84xf32>, vector<84x10xf32>, vector<2x10xf32> -> vector<2x10xf32>
    %c0_15 = arith.constant 0 : index
    %c0_16 = arith.constant 0 : index
    %23 = vector.load %arg7[%c0_15, %c0_16] : memref<1x10xf32, #tpu.memory_space<vmem>>, vector<1x10xf32>
    %24 = vector.broadcast %23 : vector<1x10xf32> to vector<2x10xf32>
    %25 = arith.addf %22, %24 : vector<2x10xf32>
    %c0_17 = arith.constant 0 : index
    %c0_18 = arith.constant 0 : index
    %26 = vector.load %arg8[%c0_17, %c0_18] : memref<2x10xf32, #tpu.memory_space<vmem>>, vector<2x10xf32>
    tpu.vector_store %arg8[%c0_17, %c0_18], %25 {strides = array<i32>} : memref<2x10xf32, #tpu.memory_space<vmem>>, vector<2x10xf32>,
    return
  }
  func.func @transform_0(%arg0: i32) -> (i32, i32) {
    %c0_i32 = arith.constant 0 : i32
    %c0_i32_0 = arith.constant 0 : i32
    return %arg0, %c0_i32 : i32, i32
  }
  func.func @transform_1(%arg0: i32) -> (i32, i32) {
    %c0_i32 = arith.constant 0 : i32
    %c0_i32_0 = arith.constant 0 : i32
    %c0_i32_1 = arith.constant 0 : i32
    return %c0_i32, %c0_i32_0 : i32, i32
  }
  func.func @transform_2(%arg0: i32) -> (i32, i32) {
    %c0_i32 = arith.constant 0 : i32
    %c0_i32_0 = arith.constant 0 : i32
    %c0_i32_1 = arith.constant 0 : i32
    return %c0_i32, %c0_i32_0 : i32, i32
  }
  func.func @transform_3(%arg0: i32) -> (i32, i32) {
    %c0_i32 = arith.constant 0 : i32
    %c0_i32_0 = arith.constant 0 : i32
    %c0_i32_1 = arith.constant 0 : i32
    return %c0_i32, %c0_i32_0 : i32, i32
  }
  func.func @transform_4(%arg0: i32) -> (i32, i32) {
    %c0_i32 = arith.constant 0 : i32
    %c0_i32_0 = arith.constant 0 : i32
    %c0_i32_1 = arith.constant 0 : i32
    return %c0_i32, %c0_i32_0 : i32, i32
  }
  func.func @transform_5(%arg0: i32) -> (i32, i32) {
    %c0_i32 = arith.constant 0 : i32
    %c0_i32_0 = arith.constant 0 : i32
    %c0_i32_1 = arith.constant 0 : i32
    return %c0_i32, %c0_i32_0 : i32, i32
  }
  func.func @transform_6(%arg0: i32) -> (i32, i32) {
    %c0_i32 = arith.constant 0 : i32
    %c0_i32_0 = arith.constant 0 : i32
    %c0_i32_1 = arith.constant 0 : i32
    return %c0_i32, %c0_i32_0 : i32, i32
  }
  func.func @transform_7(%arg0: i32) -> (i32, i32) {
    %c0_i32 = arith.constant 0 : i32
    %c0_i32_0 = arith.constant 0 : i32
    return %arg0, %c0_i32 : i32, i32
  }
}

</mosaic_0001>

<llo_original>
// kernel: lenet_forward.3
$region0: #{lenet_forward.3}
  #allocation0 [shape = 'u32[]', space=smem, size = 0x4, offset = 0x4, fixed_abs, tag = 'smem constant byte address 0x4 - core index']
  #allocation1 [shape = 'u32[72,128]{1,0:T(1,128)}', space=vmem, size = 0x9000, scoped, tag = 'internal scratch']
  %s0 = inlined_call_operand.vmem [shape: f32[288,25], index: 0, kind: input, shape index: {}]
  %s1 = inlined_call_operand.vmem [shape: f32[288,25], index: 1, kind: input, shape index: {}]
  %s2 = inlined_call_operand.vmem [shape: f32[288,25], index: 2, kind: input, shape index: {}]
  %s3 = inlined_call_operand.vmem [shape: f32[288,25], index: 3, kind: input, shape index: {}]
  %s4 = inlined_call_operand.vmem [shape: f32[25,6], index: 4, kind: input, shape index: {}]
  %s5 = inlined_call_operand.vmem [shape: f32[1,6], index: 5, kind: input, shape index: {}]
  %s6 = inlined_call_operand.vmem [shape: f32[288,6], index: 6, kind: output, shape index: {}]
  %s7 = sld [smem:[#allocation0]]
  $region34: #{lenet_forward.3} parent=0
    _
  %s9 = ssub.s32 1, %s7
  %s10 = scalar_select 0, %s9, %s7
  // Predicated region
  $region2: #{lenet_forward.3} parent=0 // pred_check
    _
  $region3: #{lenet_forward.3} parent=0 // pred_check_branch
    %12 = sbr.rel (0) target = $region5
  $region4: #{lenet_forward.3} parent=0 // pred_region
    _
  $region5: #{lenet_forward.3} parent=0 // pred_fallthru
    _
  // Predicated region
  $region6: #{lenet_forward.3} parent=0 // pred_check
    _
  $region7: #{lenet_forward.3} parent=0 // pred_check_branch
    %14 = sbr.rel (0) target = $region9
  $region8: #{lenet_forward.3} parent=0 // pred_region
    _
  $region9: #{lenet_forward.3} parent=0 // pred_fallthru
    _
  // Predicated region
  $region10: #{lenet_forward.3} parent=0 // pred_check
    _
  $region11: #{lenet_forward.3} parent=0 // pred_check_branch
    %16 = sbr.rel (0) target = $region13
  $region12: #{lenet_forward.3} parent=0 // pred_region
    _
  $region13: #{lenet_forward.3} parent=0 // pred_fallthru
    _
  // Predicated region
  $region14: #{lenet_forward.3} parent=0 // pred_check
    _
  $region15: #{lenet_forward.3} parent=0 // pred_check_branch
    %18 = sbr.rel (0) target = $region17
  $region16: #{lenet_forward.3} parent=0 // pred_region
    _
  $region17: #{lenet_forward.3} parent=0 // pred_fallthru
    _
  // Predicated region
  $region18: #{lenet_forward.3} parent=0 // pred_check
    _
  $region19: #{lenet_forward.3} parent=0 // pred_check_branch
    %20 = sbr.rel (0) target = $region21
  $region20: #{lenet_forward.3} parent=0 // pred_region
    _
  $region21: #{lenet_forward.3} parent=0 // pred_fallthru
    _
  // Predicated region
  $region22: #{lenet_forward.3} parent=0 // pred_check
    _
  $region23: #{lenet_forward.3} parent=0 // pred_check_branch
    %22 = sbr.rel (0) target = $region25
  $region24: #{lenet_forward.3} parent=0 // pred_region
    _
  $region25: #{lenet_forward.3} parent=0 // pred_fallthru
    _
  %v23 = vld [vmem:[%s4] sm:$0xff]
  %v24 = vld [vmem:[%s4 + $0x8] sm:$0xff]
  %v25 = vld [vmem:[%s4 + $0x10] sm:$0xff]
  %v26 = vld [vmem:[%s4 + $0x18] sm:$0x1]
  %v27 = vld [vmem:[%s0] sm:$0xff]
  %v28 = vld [vmem:[%s0 + $0x8] sm:$0xff]
  %v29 = vld [vmem:[%s0 + $0x10] sm:$0xff]
  %v30 = vld [vmem:[%s0 + $0x18] sm:$0xff]
  %v31 = vld [vmem:[%s0 + $0x20] sm:$0xff]
  %v32 = vld [vmem:[%s0 + $0x28] sm:$0xff]
  %v33 = vld [vmem:[%s0 + $0x30] sm:$0xff]
  %v34 = vld [vmem:[%s0 + $0x38] sm:$0xff]
  %v35 = vld [vmem:[%s0 + $0x40] sm:$0xff]
  %v36 = vld [vmem:[%s0 + $0x48] sm:$0xff]
  %v37 = vld [vmem:[%s0 + $0x50] sm:$0xff]
  %v38 = vld [vmem:[%s0 + $0x58] sm:$0xff]
  %v39 = vld [vmem:[%s0 + $0x60] sm:$0xff]
  %v40 = vld [vmem:[%s0 + $0x68] sm:$0xff]
  %v41 = vld [vmem:[%s0 + $0x70] sm:$0xff]
  %v42 = vld [vmem:[%s0 + $0x78] sm:$0xff]
  %v43 = vld [vmem:[%s0 + $0x80] sm:$0xff]
  %v44 = vld [vmem:[%s0 + $0x88] sm:$0xff]
  %v45 = vld [vmem:[%s0 + $0x90] sm:$0xff]
  %v46 = vld [vmem:[%s0 + $0x98] sm:$0xff]
  %v47 = vld [vmem:[%s0 + $0xa0] sm:$0xff]
  %v48 = vld [vmem:[%s0 + $0xa8] sm:$0xff]
  %v49 = vld [vmem:[%s0 + $0xb0] sm:$0xff]
  %v50 = vld [vmem:[%s0 + $0xb8] sm:$0xff]
  %v51 = vld [vmem:[%s0 + $0xc0] sm:$0xff]
  %v52 = vld [vmem:[%s0 + $0xc8] sm:$0xff]
  %v53 = vld [vmem:[%s0 + $0xd0] sm:$0xff]
  %v54 = vld [vmem:[%s0 + $0xd8] sm:$0xff]
  %v55 = vld [vmem:[%s0 + $0xe0] sm:$0xff]
  %v56 = vld [vmem:[%s0 + $0xe8] sm:$0xff]
  %v57 = vld [vmem:[%s0 + $0xf0] sm:$0xff]
  %v58 = vld [vmem:[%s0 + $0xf8] sm:$0xff]
  %v59 = vld [vmem:[%s0 + $0x100] sm:$0xff]
  %v60 = vld [vmem:[%s0 + $0x108] sm:$0xff]
  %v61 = vld [vmem:[%s0 + $0x110] sm:$0xff]
  %v62 = vld [vmem:[%s0 + $0x118] sm:$0xff]
  %vm63 = vcmask 203776
  %v65 = vsel %vm63, %v27, 0
  %v68 = vsel %vm63, %v28, 0
  %v71 = vsel %vm63, %v29, 0
  %v74 = vsel %vm63, %v30, 0
  %v77 = vsel %vm63, %v31, 0
  %v80 = vsel %vm63, %v32, 0
  %v83 = vsel %vm63, %v33, 0
  %v86 = vsel %vm63, %v34, 0
  %v89 = vsel %vm63, %v35, 0
  %v92 = vsel %vm63, %v36, 0
  %v95 = vsel %vm63, %v37, 0
  %v98 = vsel %vm63, %v38, 0
  %v101 = vsel %vm63, %v39, 0
  %v104 = vsel %vm63, %v40, 0
  %v107 = vsel %vm63, %v41, 0
  %v110 = vsel %vm63, %v42, 0
  %v113 = vsel %vm63, %v43, 0
  %v116 = vsel %vm63, %v44, 0
  %v119 = vsel %vm63, %v45, 0
  %v122 = vsel %vm63, %v46, 0
  %v125 = vsel %vm63, %v47, 0
  %v128 = vsel %vm63, %v48, 0
  %v131 = vsel %vm63, %v49, 0
  %v134 = vsel %vm63, %v50, 0
  %v137 = vsel %vm63, %v51, 0
  %v140 = vsel %vm63, %v52, 0
  %v143 = vsel %vm63, %v53, 0
  %v146 = vsel %vm63, %v54, 0
  %v149 = vsel %vm63, %v55, 0
  %v152 = vsel %vm63, %v56, 0
  %v155 = vsel %vm63, %v57, 0
  %v158 = vsel %vm63, %v58, 0
  %v161 = vsel %vm63, %v59, 0
  %v164 = vsel %vm63, %v60, 0
  %v167 = vsel %vm63, %v61, 0
  %v170 = vsel %vm63, %v62, 0
  %vm172 = vcmask 1040384
  %v174 = vsel %vm172, %v26, 0
  %176 = vmatpush.msra.mxu0 0.0
  %177 = vmatpush.msra.mxu0 0.0
  %178 = vmatpush.msra.mxu0 0.0
  %179 = vmatpush.msra.mxu0 0.0
  %180 = vmatpush.msra.mxu0 0.0
  %181 = vmatpush.msra.mxu0 0.0
  %182 = vmatpush.msra.mxu0 0.0
  %183 = vmatpush.msra.mxu0 0.0
  %184 = vmatpush.msra.mxu0 0.0
  %185 = vmatpush.msra.mxu0 0.0
  %186 = vmatpush.msra.mxu0 0.0
  %187 = vmatpush.msra.mxu0 0.0
  %188 = vmatpush.msra.mxu0 %v174
  %189 = vmatpush.msra.mxu0 %v25
  %190 = vmatpush.msra.mxu0 %v24
  %191 = vmatpush.msra.mxu0 %v23
  %192 = vmatmul.f32.gmra.mxu0 %v65
  %v193 = vpop.f32.mrf.mxu0
  %v194 = vadd.f32 0.0, %v193
  %195 = vmatmul.f32.gmra.mxu0 %v68
  %v196 = vpop.f32.mrf.mxu0
  %v197 = vadd.f32 0.0, %v196
  %198 = vmatmul.f32.gmra.mxu0 %v71
  %v199 = vpop.f32.mrf.mxu0
  %v200 = vadd.f32 0.0, %v199
  %201 = vmatmul.f32.gmra.mxu0 %v74
  %v202 = vpop.f32.mrf.mxu0
  %v203 = vadd.f32 0.0, %v202
  %204 = vmatmul.f32.gmra.mxu0 %v77
  %v205 = vpop.f32.mrf.mxu0
  %v206 = vadd.f32 0.0, %v205
  %207 = vmatmul.f32.gmra.mxu0 %v80
  %v208 = vpop.f32.mrf.mxu0
  %v209 = vadd.f32 0.0, %v208
  %210 = vmatmul.f32.gmra.mxu0 %v83
  %v211 = vpop.f32.mrf.mxu0
  %v212 = vadd.f32 0.0, %v211
  %213 = vmatmul.f32.gmra.mxu0 %v86
  %v214 = vpop.f32.mrf.mxu0
  %v215 = vadd.f32 0.0, %v214
  %216 = vmatmul.f32.gmra.mxu0 %v89
  %v217 = vpop.f32.mrf.mxu0
  %v218 = vadd.f32 0.0, %v217
  %219 = vmatmul.f32.gmra.mxu0 %v92
  %v220 = vpop.f32.mrf.mxu0
  %v221 = vadd.f32 0.0, %v220
  %222 = vmatmul.f32.gmra.mxu0 %v95
  %v223 = vpop.f32.mrf.mxu0
  %v224 = vadd.f32 0.0, %v223
  %225 = vmatmul.f32.gmra.mxu0 %v98
  %v226 = vpop.f32.mrf.mxu0
  %v227 = vadd.f32 0.0, %v226
  %228 = vmatmul.f32.gmra.mxu0 %v101
  %v229 = vpop.f32.mrf.mxu0
  %v230 = vadd.f32 0.0, %v229
  %231 = vmatmul.f32.gmra.mxu0 %v104
  %v232 = vpop.f32.mrf.mxu0
  %v233 = vadd.f32 0.0, %v232
  %234 = vmatmul.f32.gmra.mxu0 %v107
  %v235 = vpop.f32.mrf.mxu0
  %v236 = vadd.f32 0.0, %v235
  %237 = vmatmul.f32.gmra.mxu0 %v110
  %v238 = vpop.f32.mrf.mxu0
  %v239 = vadd.f32 0.0, %v238
  %240 = vmatmul.f32.gmra.mxu0 %v113
  %v241 = vpop.f32.mrf.mxu0
  %v242 = vadd.f32 0.0, %v241
  %243 = vmatmul.f32.gmra.mxu0 %v116
  %v244 = vpop.f32.mrf.mxu0
  %v245 = vadd.f32 0.0, %v244
  %246 = vmatmul.f32.gmra.mxu0 %v119
  %v247 = vpop.f32.mrf.mxu0
  %v248 = vadd.f32 0.0, %v247
  %249 = vmatmul.f32.gmra.mxu0 %v122
  %v250 = vpop.f32.mrf.mxu0
  %v251 = vadd.f32 0.0, %v250
  %252 = vmatmul.f32.gmra.mxu0 %v125
  %v253 = vpop.f32.mrf.mxu0
  %v254 = vadd.f32 0.0, %v253
  %255 = vmatmul.f32.gmra.mxu0 %v128
  %v256 = vpop.f32.mrf.mxu0
  %v257 = vadd.f32 0.0, %v256
  %258 = vmatmul.f32.gmra.mxu0 %v131
  %v259 = vpop.f32.mrf.mxu0
  %v260 = vadd.f32 0.0, %v259
  %261 = vmatmul.f32.gmra.mxu0 %v134
  %v262 = vpop.f32.mrf.mxu0
  %v263 = vadd.f32 0.0, %v262
  %264 = vmatmul.f32.gmra.mxu0 %v137
  %v265 = vpop.f32.mrf.mxu0
  %v266 = vadd.f32 0.0, %v265
  %267 = vmatmul.f32.gmra.mxu0 %v140
  %v268 = vpop.f32.mrf.mxu0
  %v269 = vadd.f32 0.0, %v268
  %270 = vmatmul.f32.gmra.mxu0 %v143
  %v271 = vpop.f32.mrf.mxu0
  %v272 = vadd.f32 0.0, %v271
  %273 = vmatmul.f32.gmra.mxu0 %v146
  %v274 = vpop.f32.mrf.mxu0
  %v275 = vadd.f32 0.0, %v274
  %276 = vmatmul.f32.gmra.mxu0 %v149
  %v277 = vpop.f32.mrf.mxu0
  %v278 = vadd.f32 0.0, %v277
  %279 = vmatmul.f32.gmra.mxu0 %v152
  %v280 = vpop.f32.mrf.mxu0
  %v281 = vadd.f32 0.0, %v280
  %282 = vmatmul.f32.gmra.mxu0 %v155
  %v283 = vpop.f32.mrf.mxu0
  %v284 = vadd.f32 0.0, %v283
  %285 = vmatmul.f32.gmra.mxu0 %v158
  %v286 = vpop.f32.mrf.mxu0
  %v287 = vadd.f32 0.0, %v286
  %288 = vmatmul.f32.gmra.mxu0 %v161
  %v289 = vpop.f32.mrf.mxu0
  %v290 = vadd.f32 0.0, %v289
  %291 = vmatmul.f32.gmra.mxu0 %v164
  %v292 = vpop.f32.mrf.mxu0
  %v293 = vadd.f32 0.0, %v292
  %294 = vmatmul.f32.gmra.mxu0 %v167
  %v295 = vpop.f32.mrf.mxu0
  %v296 = vadd.f32 0.0, %v295
  %297 = vmatmul.f32.gmra.mxu0 %v170
  %v298 = vpop.f32.mrf.mxu0
  %v299 = vadd.f32 0.0, %v298
  %300 = vdwg.mxu0
  %v301 = vld [vmem:[%s1] sm:$0xff]
  %v302 = vld [vmem:[%s1 + $0x8] sm:$0xff]
  %v303 = vld [vmem:[%s1 + $0x10] sm:$0xff]
  %v304 = vld [vmem:[%s1 + $0x18] sm:$0xff]
  %v305 = vld [vmem:[%s1 + $0x20] sm:$0xff]
  %v306 = vld [vmem:[%s1 + $0x28] sm:$0xff]
  %v307 = vld [vmem:[%s1 + $0x30] sm:$0xff]
  %v308 = vld [vmem:[%s1 + $0x38] sm:$0xff]
  %v309 = vld [vmem:[%s1 + $0x40] sm:$0xff]
  %v310 = vld [vmem:[%s1 + $0x48] sm:$0xff]
  %v311 = vld [vmem:[%s1 + $0x50] sm:$0xff]
  %v312 = vld [vmem:[%s1 + $0x58] sm:$0xff]
  %v313 = vld [vmem:[%s1 + $0x60] sm:$0xff]
  %v314 = vld [vmem:[%s1 + $0x68] sm:$0xff]
  %v315 = vld [vmem:[%s1 + $0x70] sm:$0xff]
  %v316 = vld [vmem:[%s1 + $0x78] sm:$0xff]
  %v317 = vld [vmem:[%s1 + $0x80] sm:$0xff]
  %v318 = vld [vmem:[%s1 + $0x88] sm:$0xff]
  %v319 = vld [vmem:[%s1 + $0x90] sm:$0xff]
  %v320 = vld [vmem:[%s1 + $0x98] sm:$0xff]
  %v321 = vld [vmem:[%s1 + $0xa0] sm:$0xff]
  %v322 = vld [vmem:[%s1 + $0xa8] sm:$0xff]
  %v323 = vld [vmem:[%s1 + $0xb0] sm:$0xff]
  %v324 = vld [vmem:[%s1 + $0xb8] sm:$0xff]
  %v325 = vld [vmem:[%s1 + $0xc0] sm:$0xff]
  %v326 = vld [vmem:[%s1 + $0xc8] sm:$0xff]
  %v327 = vld [vmem:[%s1 + $0xd0] sm:$0xff]
  %v328 = vld [vmem:[%s1 + $0xd8] sm:$0xff]
  %v329 = vld [vmem:[%s1 + $0xe0] sm:$0xff]
  %v330 = vld [vmem:[%s1 + $0xe8] sm:$0xff]
  %v331 = vld [vmem:[%s1 + $0xf0] sm:$0xff]
  %v332 = vld [vmem:[%s1 + $0xf8] sm:$0xff]
  %v333 = vld [vmem:[%s1 + $0x100] sm:$0xff]
  %v334 = vld [vmem:[%s1 + $0x108] sm:$0xff]
  %v335 = vld [vmem:[%s1 + $0x110] sm:$0xff]
  %v336 = vld [vmem:[%s1 + $0x118] sm:$0xff]
  %v338 = vsel %vm63, %v301, 0
  %v341 = vsel %vm63, %v302, 0
  %v344 = vsel %vm63, %v303, 0
  %v347 = vsel %vm63, %v304, 0
  %v350 = vsel %vm63, %v305, 0
  %v353 = vsel %vm63, %v306, 0
  %v356 = vsel %vm63, %v307, 0
  %v359 = vsel %vm63, %v308, 0
  %v362 = vsel %vm63, %v309, 0
  %v365 = vsel %vm63, %v310, 0
  %v368 = vsel %vm63, %v311, 0
  %v371 = vsel %vm63, %v312, 0
  %v374 = vsel %vm63, %v313, 0
  %v377 = vsel %vm63, %v314, 0
  %v380 = vsel %vm63, %v315, 0
  %v383 = vsel %vm63, %v316, 0
  %v386 = vsel %vm63, %v317, 0
  %v389 = vsel %vm63, %v318, 0
  %v392 = vsel %vm63, %v319, 0
  %v395 = vsel %vm63, %v320, 0
  %v398 = vsel %vm63, %v321, 0
  %v401 = vsel %vm63, %v322, 0
  %v404 = vsel %vm63, %v323, 0
  %v407 = vsel %vm63, %v324, 0
  %v410 = vsel %vm63, %v325, 0
  %v413 = vsel %vm63, %v326, 0
  %v416 = vsel %vm63, %v327, 0
  %v419 = vsel %vm63, %v328, 0
  %v422 = vsel %vm63, %v329, 0
  %v425 = vsel %vm63, %v330, 0
  %v428 = vsel %vm63, %v331, 0
  %v431 = vsel %vm63, %v332, 0
  %v434 = vsel %vm63, %v333, 0
  %v437 = vsel %vm63, %v334, 0
  %v440 = vsel %vm63, %v335, 0
  %v443 = vsel %vm63, %v336, 0
  %445 = vmatpush.msra.mxu0 0.0
  %446 = vmatpush.msra.mxu0 0.0
  %447 = vmatpush.msra.mxu0 0.0
  %448 = vmatpush.msra.mxu0 0.0
  %449 = vmatpush.msra.mxu0 0.0
  %450 = vmatpush.msra.mxu0 0.0
  %451 = vmatpush.msra.mxu0 0.0
  %452 = vmatpush.msra.mxu0 0.0
  %453 = vmatpush.msra.mxu0 0.0
  %454 = vmatpush.msra.mxu0 0.0
  %455 = vmatpush.msra.mxu0 0.0
  %456 = vmatpush.msra.mxu0 0.0
  %457 = vmatpush.msra.mxu0 %v174
  %458 = vmatpush.msra.mxu0 %v25
  %459 = vmatpush.msra.mxu0 %v24
  %460 = vmatpush.msra.mxu0 %v23
  %461 = vmatmul.f32.gmra.mxu0 %v338
  %v462 = vpop.f32.mrf.mxu0
  %v463 = vadd.f32 0.0, %v462
  %464 = vmatmul.f32.gmra.mxu0 %v341
  %v465 = vpop.f32.mrf.mxu0
  %v466 = vadd.f32 0.0, %v465
  %467 = vmatmul.f32.gmra.mxu0 %v344
  %v468 = vpop.f32.mrf.mxu0
  %v469 = vadd.f32 0.0, %v468
  %470 = vmatmul.f32.gmra.mxu0 %v347
  %v471 = vpop.f32.mrf.mxu0
  %v472 = vadd.f32 0.0, %v471
  %473 = vmatmul.f32.gmra.mxu0 %v350
  %v474 = vpop.f32.mrf.mxu0
  %v475 = vadd.f32 0.0, %v474
  %476 = vmatmul.f32.gmra.mxu0 %v353
  %v477 = vpop.f32.mrf.mxu0
  %v478 = vadd.f32 0.0, %v477
  %479 = vmatmul.f32.gmra.mxu0 %v356
  %v480 = vpop.f32.mrf.mxu0
  %v481 = vadd.f32 0.0, %v480
  %482 = vmatmul.f32.gmra.mxu0 %v359
  %v483 = vpop.f32.mrf.mxu0
  %v484 = vadd.f32 0.0, %v483
  %485 = vmatmul.f32.gmra.mxu0 %v362
  %v486 = vpop.f32.mrf.mxu0
  %v487 = vadd.f32 0.0, %v486
  %488 = vmatmul.f32.gmra.mxu0 %v365
  %v489 = vpop.f32.mrf.mxu0
  %v490 = vadd.f32 0.0, %v489
  %491 = vmatmul.f32.gmra.mxu0 %v368
  %v492 = vpop.f32.mrf.mxu0
  %v493 = vadd.f32 0.0, %v492
  %494 = vmatmul.f32.gmra.mxu0 %v371
  %v495 = vpop.f32.mrf.mxu0
  %v496 = vadd.f32 0.0, %v495
  %497 = vmatmul.f32.gmra.mxu0 %v374
  %v498 = vpop.f32.mrf.mxu0
  %v499 = vadd.f32 0.0, %v498
  %500 = vmatmul.f32.gmra.mxu0 %v377
  %v501 = vpop.f32.mrf.mxu0
  %v502 = vadd.f32 0.0, %v501
  %503 = vmatmul.f32.gmra.mxu0 %v380
  %v504 = vpop.f32.mrf.mxu0
  %v505 = vadd.f32 0.0, %v504
  %506 = vmatmul.f32.gmra.mxu0 %v383
  %v507 = vpop.f32.mrf.mxu0
  %v508 = vadd.f32 0.0, %v507
  %509 = vmatmul.f32.gmra.mxu0 %v386
  %v510 = vpop.f32.mrf.mxu0
  %v511 = vadd.f32 0.0, %v510
  %512 = vmatmul.f32.gmra.mxu0 %v389
  %v513 = vpop.f32.mrf.mxu0
  %v514 = vadd.f32 0.0, %v513
  %515 = vmatmul.f32.gmra.mxu0 %v392
  %v516 = vpop.f32.mrf.mxu0
  %v517 = vadd.f32 0.0, %v516
  %518 = vmatmul.f32.gmra.mxu0 %v395
  %v519 = vpop.f32.mrf.mxu0
  %v520 = vadd.f32 0.0, %v519
  %521 = vmatmul.f32.gmra.mxu0 %v398
  %v522 = vpop.f32.mrf.mxu0
  %v523 = vadd.f32 0.0, %v522
  %524 = vmatmul.f32.gmra.mxu0 %v401
  %v525 = vpop.f32.mrf.mxu0
  %v526 = vadd.f32 0.0, %v525
  %527 = vmatmul.f32.gmra.mxu0 %v404
  %v528 = vpop.f32.mrf.mxu0
  %v529 = vadd.f32 0.0, %v528
  %530 = vmatmul.f32.gmra.mxu0 %v407
  %v531 = vpop.f32.mrf.mxu0
  %v532 = vadd.f32 0.0, %v531
  %533 = vmatmul.f32.gmra.mxu0 %v410
  %v534 = vpop.f32.mrf.mxu0
  %v535 = vadd.f32 0.0, %v534
  %536 = vmatmul.f32.gmra.mxu0 %v413
  %v537 = vpop.f32.mrf.mxu0
  %v538 = vadd.f32 0.0, %v537
  %539 = vmatmul.f32.gmra.mxu0 %v416
  %v540 = vpop.f32.mrf.mxu0
  %v541 = vadd.f32 0.0, %v540
  %542 = vmatmul.f32.gmra.mxu0 %v419
  %v543 = vpop.f32.mrf.mxu0
  %v544 = vadd.f32 0.0, %v543
  %545 = vmatmul.f32.gmra.mxu0 %v422
  %v546 = vpop.f32.mrf.mxu0
  %v547 = vadd.f32 0.0, %v546
  %548 = vmatmul.f32.gmra.mxu0 %v425
  %v549 = vpop.f32.mrf.mxu0
  %v550 = vadd.f32 0.0, %v549
  %551 = vmatmul.f32.gmra.mxu0 %v428
  %v552 = vpop.f32.mrf.mxu0
  %v553 = vadd.f32 0.0, %v552
  %554 = vmatmul.f32.gmra.mxu0 %v431
  %v555 = vpop.f32.mrf.mxu0
  %v556 = vadd.f32 0.0, %v555
  %557 = vmatmul.f32.gmra.mxu0 %v434
  %v558 = vpop.f32.mrf.mxu0
  %v559 = vadd.f32 0.0, %v558
  %560 = vmatmul.f32.gmra.mxu0 %v437
  %v561 = vpop.f32.mrf.mxu0
  %v562 = vadd.f32 0.0, %v561
  %563 = vmatmul.f32.gmra.mxu0 %v440
  %v564 = vpop.f32.mrf.mxu0
  %v565 = vadd.f32 0.0, %v564
  %566 = vmatmul.f32.gmra.mxu0 %v443
  %v567 = vpop.f32.mrf.mxu0
  %v568 = vadd.f32 0.0, %v567
  %569 = vdwg.mxu0
  %v570 = vmax.f32 %v194, %v463
  %v571 = vmax.f32 %v197, %v466
  %v572 = vmax.f32 %v200, %v469
  %v573 = vmax.f32 %v203, %v472
  %v574 = vmax.f32 %v206, %v475
  %v575 = vmax.f32 %v209, %v478
  %v576 = vmax.f32 %v212, %v481
  %v577 = vmax.f32 %v215, %v484
  %v578 = vmax.f32 %v218, %v487
  %v579 = vmax.f32 %v221, %v490
  %v580 = vmax.f32 %v224, %v493
  %v581 = vmax.f32 %v227, %v496
  %v582 = vmax.f32 %v230, %v499
  %v583 = vmax.f32 %v233, %v502
  %v584 = vmax.f32 %v236, %v505
  %v585 = vmax.f32 %v239, %v508
  %v586 = vmax.f32 %v242, %v511
  %v587 = vmax.f32 %v245, %v514
  %v588 = vmax.f32 %v248, %v517
  %v589 = vmax.f32 %v251, %v520
  %v590 = vmax.f32 %v254, %v523
  %v591 = vmax.f32 %v257, %v526
  %v592 = vmax.f32 %v260, %v529
  %v593 = vmax.f32 %v263, %v532
  %v594 = vmax.f32 %v266, %v535
  %v595 = vmax.f32 %v269, %v538
  %v596 = vmax.f32 %v272, %v541
  %v597 = vmax.f32 %v275, %v544
  %v598 = vmax.f32 %v278, %v547
  %v599 = vmax.f32 %v281, %v550
  %v600 = vmax.f32 %v284, %v553
  %v601 = vmax.f32 %v287, %v556
  %v602 = vmax.f32 %v290, %v559
  %v603 = vmax.f32 %v293, %v562
  %v604 = vmax.f32 %v296, %v565
  %v605 = vmax.f32 %v299, %v568
  %v606 = vld [vmem:[%s2] sm:$0xff]
  %v607 = vld [vmem:[%s2 + $0x8] sm:$0xff]
  %v608 = vld [vmem:[%s2 + $0x10] sm:$0xff]
  %v609 = vld [vmem:[%s2 + $0x18] sm:$0xff]
  %v610 = vld [vmem:[%s2 + $0x20] sm:$0xff]
  %v611 = vld [vmem:[%s2 + $0x28] sm:$0xff]
  %v612 = vld [vmem:[%s2 + $0x30] sm:$0xff]
  %v613 = vld [vmem:[%s2 + $0x38] sm:$0xff]
  %v614 = vld [vmem:[%s2 + $0x40] sm:$0xff]
  %v615 = vld [vmem:[%s2 + $0x48] sm:$0xff]
  %v616 = vld [vmem:[%s2 + $0x50] sm:$0xff]
  %v617 = vld [vmem:[%s2 + $0x58] sm:$0xff]
  %v618 = vld [vmem:[%s2 + $0x60] sm:$0xff]
  %v619 = vld [vmem:[%s2 + $0x68] sm:$0xff]
  %v620 = vld [vmem:[%s2 + $0x70] sm:$0xff]
  %v621 = vld [vmem:[%s2 + $0x78] sm:$0xff]
  %v622 = vld [vmem:[%s2 + $0x80] sm:$0xff]
  %v623 = vld [vmem:[%s2 + $0x88] sm:$0xff]
  %v624 = vld [vmem:[%s2 + $0x90] sm:$0xff]
  %v625 = vld [vmem:[%s2 + $0x98] sm:$0xff]
  %v626 = vld [vmem:[%s2 + $0xa0] sm:$0xff]
  %v627 = vld [vmem:[%s2 + $0xa8] sm:$0xff]
  %v628 = vld [vmem:[%s2 + $0xb0] sm:$0xff]
  %v629 = vld [vmem:[%s2 + $0xb8] sm:$0xff]
  %v630 = vld [vmem:[%s2 + $0xc0] sm:$0xff]
  %v631 = vld [vmem:[%s2 + $0xc8] sm:$0xff]
  %v632 = vld [vmem:[%s2 + $0xd0] sm:$0xff]
  %v633 = vld [vmem:[%s2 + $0xd8] sm:$0xff]
  %v634 = vld [vmem:[%s2 + $0xe0] sm:$0xff]
  %v635 = vld [vmem:[%s2 + $0xe8] sm:$0xff]
  %v636 = vld [vmem:[%s2 + $0xf0] sm:$0xff]
  %v637 = vld [vmem:[%s2 + $0xf8] sm:$0xff]
  %v638 = vld [vmem:[%s2 + $0x100] sm:$0xff]
  %v639 = vld [vmem:[%s2 + $0x108] sm:$0xff]
  %v640 = vld [vmem:[%s2 + $0x110] sm:$0xff]
  %v641 = vld [vmem:[%s2 + $0x118] sm:$0xff]
  %v643 = vsel %vm63, %v606, 0
  %v646 = vsel %vm63, %v607, 0
  %v649 = vsel %vm63, %v608, 0
  %v652 = vsel %vm63, %v609, 0
  %v655 = vsel %vm63, %v610, 0
  %v658 = vsel %vm63, %v611, 0
  %v661 = vsel %vm63, %v612, 0
  %v664 = vsel %vm63, %v613, 0
  %v667 = vsel %vm63, %v614, 0
  %v670 = vsel %vm63, %v615, 0
  %v673 = vsel %vm63, %v616, 0
  %v676 = vsel %vm63, %v617, 0
  %v679 = vsel %vm63, %v618, 0
  %v682 = vsel %vm63, %v619, 0
  %v685 = vsel %vm63, %v620, 0
  %v688 = vsel %vm63, %v621, 0
  %v691 = vsel %vm63, %v622, 0
  %v694 = vsel %vm63, %v623, 0
  %v697 = vsel %vm63, %v624, 0
  %v700 = vsel %vm63, %v625, 0
  %v703 = vsel %vm63, %v626, 0
  %v706 = vsel %vm63, %v627, 0
  %v709 = vsel %vm63, %v628, 0
  %v712 = vsel %vm63, %v629, 0
  %v715 = vsel %vm63, %v630, 0
  %v718 = vsel %vm63, %v631, 0
  %v721 = vsel %vm63, %v632, 0
  %v724 = vsel %vm63, %v633, 0
  %v727 = vsel %vm63, %v634, 0
  %v730 = vsel %vm63, %v635, 0
  %v733 = vsel %vm63, %v636, 0
  %v736 = vsel %vm63, %v637, 0
  %v739 = vsel %vm63, %v638, 0
  %v742 = vsel %vm63, %v639, 0
  %v745 = vsel %vm63, %v640, 0
  %v748 = vsel %vm63, %v641, 0
  %750 = vmatpush.msra.mxu0 0.0
  %751 = vmatpush.msra.mxu0 0.0
  %752 = vmatpush.msra.mxu0 0.0
  %753 = vmatpush.msra.mxu0 0.0
  %754 = vmatpush.msra.mxu0 0.0
  %755 = vmatpush.msra.mxu0 0.0
  %756 = vmatpush.msra.mxu0 0.0
  %757 = vmatpush.msra.mxu0 0.0
  %758 = vmatpush.msra.mxu0 0.0
  %759 = vmatpush.msra.mxu0 0.0
  %760 = vmatpush.msra.mxu0 0.0
  %761 = vmatpush.msra.mxu0 0.0
  %762 = vmatpush.msra.mxu0 %v174
  %763 = vmatpush.msra.mxu0 %v25
  %764 = vmatpush.msra.mxu0 %v24
  %765 = vmatpush.msra.mxu0 %v23
  %766 = vmatmul.f32.gmra.mxu0 %v643
  %v767 = vpop.f32.mrf.mxu0
  %v768 = vadd.f32 0.0, %v767
  %769 = vmatmul.f32.gmra.mxu0 %v646
  %v770 = vpop.f32.mrf.mxu0
  %v771 = vadd.f32 0.0, %v770
  %772 = vmatmul.f32.gmra.mxu0 %v649
  %v773 = vpop.f32.mrf.mxu0
  %v774 = vadd.f32 0.0, %v773
  %775 = vmatmul.f32.gmra.mxu0 %v652
  %v776 = vpop.f32.mrf.mxu0
  %v777 = vadd.f32 0.0, %v776
  %778 = vmatmul.f32.gmra.mxu0 %v655
  %v779 = vpop.f32.mrf.mxu0
  %v780 = vadd.f32 0.0, %v779
  %781 = vmatmul.f32.gmra.mxu0 %v658
  %v782 = vpop.f32.mrf.mxu0
  %v783 = vadd.f32 0.0, %v782
  %784 = vmatmul.f32.gmra.mxu0 %v661
  %v785 = vpop.f32.mrf.mxu0
  %v786 = vadd.f32 0.0, %v785
  %787 = vmatmul.f32.gmra.mxu0 %v664
  %v788 = vpop.f32.mrf.mxu0
  %v789 = vadd.f32 0.0, %v788
  %790 = vmatmul.f32.gmra.mxu0 %v667
  %v791 = vpop.f32.mrf.mxu0
  %v792 = vadd.f32 0.0, %v791
  %793 = vmatmul.f32.gmra.mxu0 %v670
  %v794 = vpop.f32.mrf.mxu0
  %v795 = vadd.f32 0.0, %v794
  %796 = vmatmul.f32.gmra.mxu0 %v673
  %v797 = vpop.f32.mrf.mxu0
  %v798 = vadd.f32 0.0, %v797
  %799 = vmatmul.f32.gmra.mxu0 %v676
  %v800 = vpop.f32.mrf.mxu0
  %v801 = vadd.f32 0.0, %v800
  %802 = vmatmul.f32.gmra.mxu0 %v679
  %v803 = vpop.f32.mrf.mxu0
  %v804 = vadd.f32 0.0, %v803
  %805 = vmatmul.f32.gmra.mxu0 %v682
  %v806 = vpop.f32.mrf.mxu0
  %v807 = vadd.f32 0.0, %v806
  %808 = vmatmul.f32.gmra.mxu0 %v685
  %v809 = vpop.f32.mrf.mxu0
  %v810 = vadd.f32 0.0, %v809
  %811 = vmatmul.f32.gmra.mxu0 %v688
  %v812 = vpop.f32.mrf.mxu0
  %v813 = vadd.f32 0.0, %v812
  %814 = vmatmul.f32.gmra.mxu0 %v691
  %v815 = vpop.f32.mrf.mxu0
  %v816 = vadd.f32 0.0, %v815
  %817 = vmatmul.f32.gmra.mxu0 %v694
  %v818 = vpop.f32.mrf.mxu0
  %v819 = vadd.f32 0.0, %v818
  %820 = vmatmul.f32.gmra.mxu0 %v697
  %v821 = vpop.f32.mrf.mxu0
  %v822 = vadd.f32 0.0, %v821
  %823 = vmatmul.f32.gmra.mxu0 %v700
  %v824 = vpop.f32.mrf.mxu0
  %v825 = vadd.f32 0.0, %v824
  %826 = vmatmul.f32.gmra.mxu0 %v703
  %v827 = vpop.f32.mrf.mxu0
  %v828 = vadd.f32 0.0, %v827
  %829 = vmatmul.f32.gmra.mxu0 %v706
  %v830 = vpop.f32.mrf.mxu0
  %v831 = vadd.f32 0.0, %v830
  %832 = vmatmul.f32.gmra.mxu0 %v709
  %v833 = vpop.f32.mrf.mxu0
  %v834 = vadd.f32 0.0, %v833
  %835 = vmatmul.f32.gmra.mxu0 %v712
  %v836 = vpop.f32.mrf.mxu0
  %v837 = vadd.f32 0.0, %v836
  %838 = vmatmul.f32.gmra.mxu0 %v715
  %v839 = vpop.f32.mrf.mxu0
  %v840 = vadd.f32 0.0, %v839
  %841 = vmatmul.f32.gmra.mxu0 %v718
  %v842 = vpop.f32.mrf.mxu0
  %v843 = vadd.f32 0.0, %v842
  %844 = vmatmul.f32.gmra.mxu0 %v721
  %v845 = vpop.f32.mrf.mxu0
  %v846 = vadd.f32 0.0, %v845
  %847 = vmatmul.f32.gmra.mxu0 %v724
  %v848 = vpop.f32.mrf.mxu0
  %v849 = vadd.f32 0.0, %v848
  %850 = vmatmul.f32.gmra.mxu0 %v727
  %v851 = vpop.f32.mrf.mxu0
  %v852 = vadd.f32 0.0, %v851
  %853 = vmatmul.f32.gmra.mxu0 %v730
  %v854 = vpop.f32.mrf.mxu0
  %v855 = vadd.f32 0.0, %v854
  %856 = vmatmul.f32.gmra.mxu0 %v733
  %v857 = vpop.f32.mrf.mxu0
  %v858 = vadd.f32 0.0, %v857
  %859 = vmatmul.f32.gmra.mxu0 %v736
  %v860 = vpop.f32.mrf.mxu0
  %v861 = vadd.f32 0.0, %v860
  %862 = vmatmul.f32.gmra.mxu0 %v739
  %v863 = vpop.f32.mrf.mxu0
  %v864 = vadd.f32 0.0, %v863
  %865 = vmatmul.f32.gmra.mxu0 %v742
  %v866 = vpop.f32.mrf.mxu0
  %v867 = vadd.f32 0.0, %v866
  %868 = vmatmul.f32.gmra.mxu0 %v745
  %v869 = vpop.f32.mrf.mxu0
  %v870 = vadd.f32 0.0, %v869
  %871 = vmatmul.f32.gmra.mxu0 %v748
  %v872 = vpop.f32.mrf.mxu0
  %v873 = vadd.f32 0.0, %v872
  %874 = vdwg.mxu0
  %v875 = vmax.f32 %v570, %v768
  %v876 = vmax.f32 %v571, %v771
  %v877 = vmax.f32 %v572, %v774
  %v878 = vmax.f32 %v573, %v777
  %v879 = vmax.f32 %v574, %v780
  %v880 = vmax.f32 %v575, %v783
  %v881 = vmax.f32 %v576, %v786
  %v882 = vmax.f32 %v577, %v789
  %v883 = vmax.f32 %v578, %v792
  %v884 = vmax.f32 %v579, %v795
  %v885 = vmax.f32 %v580, %v798
  %v886 = vmax.f32 %v581, %v801
  %v887 = vmax.f32 %v582, %v804
  %v888 = vmax.f32 %v583, %v807
  %v889 = vmax.f32 %v584, %v810
  %v890 = vmax.f32 %v585, %v813
  %v891 = vmax.f32 %v586, %v816
  %v892 = vmax.f32 %v587, %v819
  %v893 = vmax.f32 %v588, %v822
  %v894 = vmax.f32 %v589, %v825
  %v895 = vmax.f32 %v590, %v828
  %v896 = vmax.f32 %v591, %v831
  %v897 = vmax.f32 %v592, %v834
  %v898 = vmax.f32 %v593, %v837
  %v899 = vmax.f32 %v594, %v840
  %v900 = vmax.f32 %v595, %v843
  %v901 = vmax.f32 %v596, %v846
  %v902 = vmax.f32 %v597, %v849
  %v903 = vmax.f32 %v598, %v852
  %v904 = vmax.f32 %v599, %v855
  %v905 = vmax.f32 %v600, %v858
  %v906 = vmax.f32 %v601, %v861
  %v907 = vmax.f32 %v602, %v864
  %v908 = vmax.f32 %v603, %v867
  %v909 = vmax.f32 %v604, %v870
  %v910 = vmax.f32 %v605, %v873
  %v911 = vld [vmem:[%s3] sm:$0xff]
  %v912 = vld [vmem:[%s3 + $0x8] sm:$0xff]
  %v913 = vld [vmem:[%s3 + $0x10] sm:$0xff]
  %v914 = vld [vmem:[%s3 + $0x18] sm:$0xff]
  %v915 = vld [vmem:[%s3 + $0x20] sm:$0xff]
  %v916 = vld [vmem:[%s3 + $0x28] sm:$0xff]
  %v917 = vld [vmem:[%s3 + $0x30] sm:$0xff]
  %v918 = vld [vmem:[%s3 + $0x38] sm:$0xff]
  %v919 = vld [vmem:[%s3 + $0x40] sm:$0xff]
  %v920 = vld [vmem:[%s3 + $0x48] sm:$0xff]
  %v921 = vld [vmem:[%s3 + $0x50] sm:$0xff]
  %v922 = vld [vmem:[%s3 + $0x58] sm:$0xff]
  %v923 = vld [vmem:[%s3 + $0x60] sm:$0xff]
  %v924 = vld [vmem:[%s3 + $0x68] sm:$0xff]
  %v925 = vld [vmem:[%s3 + $0x70] sm:$0xff]
  %v926 = vld [vmem:[%s3 + $0x78] sm:$0xff]
  %v927 = vld [vmem:[%s3 + $0x80] sm:$0xff]
  %v928 = vld [vmem:[%s3 + $0x88] sm:$0xff]
  %v929 = vld [vmem:[%s3 + $0x90] sm:$0xff]
  %v930 = vld [vmem:[%s3 + $0x98] sm:$0xff]
  %v931 = vld [vmem:[%s3 + $0xa0] sm:$0xff]
  %v932 = vld [vmem:[%s3 + $0xa8] sm:$0xff]
  %v933 = vld [vmem:[%s3 + $0xb0] sm:$0xff]
  %v934 = vld [vmem:[%s3 + $0xb8] sm:$0xff]
  %v935 = vld [vmem:[%s3 + $0xc0] sm:$0xff]
  %v936 = vld [vmem:[%s3 + $0xc8] sm:$0xff]
  %v937 = vld [vmem:[%s3 + $0xd0] sm:$0xff]
  %v938 = vld [vmem:[%s3 + $0xd8] sm:$0xff]
  %v939 = vld [vmem:[%s3 + $0xe0] sm:$0xff]
  %v940 = vld [vmem:[%s3 + $0xe8] sm:$0xff]
  %v941 = vld [vmem:[%s3 + $0xf0] sm:$0xff]
  %v942 = vld [vmem:[%s3 + $0xf8] sm:$0xff]
  %v943 = vld [vmem:[%s3 + $0x100] sm:$0xff]
  %v944 = vld [vmem:[%s3 + $0x108] sm:$0xff]
  %v945 = vld [vmem:[%s3 + $0x110] sm:$0xff]
  %v946 = vld [vmem:[%s3 + $0x118] sm:$0xff]
  %v948 = vsel %vm63, %v911, 0
  %v951 = vsel %vm63, %v912, 0
  %v954 = vsel %vm63, %v913, 0
  %v957 = vsel %vm63, %v914, 0
  %v960 = vsel %vm63, %v915, 0
  %v963 = vsel %vm63, %v916, 0
  %v966 = vsel %vm63, %v917, 0
  %v969 = vsel %vm63, %v918, 0
  %v972 = vsel %vm63, %v919, 0
  %v975 = vsel %vm63, %v920, 0
  %v978 = vsel %vm63, %v921, 0
  %v981 = vsel %vm63, %v922, 0
  %v984 = vsel %vm63, %v923, 0
  %v987 = vsel %vm63, %v924, 0
  %v990 = vsel %vm63, %v925, 0
  %v993 = vsel %vm63, %v926, 0
  %v996 = vsel %vm63, %v927, 0
  %v999 = vsel %vm63, %v928, 0
  %v1002 = vsel %vm63, %v929, 0
  %v1005 = vsel %vm63, %v930, 0
  %v1008 = vsel %vm63, %v931, 0
  %v1011 = vsel %vm63, %v932, 0
  %v1014 = vsel %vm63, %v933, 0
  %v1017 = vsel %vm63, %v934, 0
  %v1020 = vsel %vm63, %v935, 0
  %v1023 = vsel %vm63, %v936, 0
  %v1026 = vsel %vm63, %v937, 0
  %v1029 = vsel %vm63, %v938, 0
  %v1032 = vsel %vm63, %v939, 0
  %v1035 = vsel %vm63, %v940, 0
  %v1038 = vsel %vm63, %v941, 0
  %v1041 = vsel %vm63, %v942, 0
  %v1044 = vsel %vm63, %v943, 0
  %v1047 = vsel %vm63, %v944, 0
  %v1050 = vsel %vm63, %v945, 0
  %v1053 = vsel %vm63, %v946, 0
  %1055 = vmatpush.msra.mxu0 0.0
  %1056 = vmatpush.msra.mxu0 0.0
  %1057 = vmatpush.msra.mxu0 0.0
  %1058 = vmatpush.msra.mxu0 0.0
  %1059 = vmatpush.msra.mxu0 0.0
  %1060 = vmatpush.msra.mxu0 0.0
  %1061 = vmatpush.msra.mxu0 0.0
  %1062 = vmatpush.msra.mxu0 0.0
  %1063 = vmatpush.msra.mxu0 0.0
  %1064 = vmatpush.msra.mxu0 0.0
  %1065 = vmatpush.msra.mxu0 0.0
  %1066 = vmatpush.msra.mxu0 0.0
  %1067 = vmatpush.msra.mxu0 %v174
  %1068 = vmatpush.msra.mxu0 %v25
  %1069 = vmatpush.msra.mxu0 %v24
  %1070 = vmatpush.msra.mxu0 %v23
  %1071 = vmatmul.f32.gmra.mxu0 %v948
  %v1072 = vpop.f32.mrf.mxu0
  %v1073 = vadd.f32 0.0, %v1072
  %1074 = vmatmul.f32.gmra.mxu0 %v951
  %v1075 = vpop.f32.mrf.mxu0
  %v1076 = vadd.f32 0.0, %v1075
  %1077 = vmatmul.f32.gmra.mxu0 %v954
  %v1078 = vpop.f32.mrf.mxu0
  %v1079 = vadd.f32 0.0, %v1078
  %1080 = vmatmul.f32.gmra.mxu0 %v957
  %v1081 = vpop.f32.mrf.mxu0
  %v1082 = vadd.f32 0.0, %v1081
  %1083 = vmatmul.f32.gmra.mxu0 %v960
  %v1084 = vpop.f32.mrf.mxu0
  %v1085 = vadd.f32 0.0, %v1084
  %1086 = vmatmul.f32.gmra.mxu0 %v963
  %v1087 = vpop.f32.mrf.mxu0
  %v1088 = vadd.f32 0.0, %v1087
  %1089 = vmatmul.f32.gmra.mxu0 %v966
  %v1090 = vpop.f32.mrf.mxu0
  %v1091 = vadd.f32 0.0, %v1090
  %1092 = vmatmul.f32.gmra.mxu0 %v969
  %v1093 = vpop.f32.mrf.mxu0
  %v1094 = vadd.f32 0.0, %v1093
  %1095 = vmatmul.f32.gmra.mxu0 %v972
  %v1096 = vpop.f32.mrf.mxu0
  %v1097 = vadd.f32 0.0, %v1096
  %1098 = vmatmul.f32.gmra.mxu0 %v975
  %v1099 = vpop.f32.mrf.mxu0
  %v1100 = vadd.f32 0.0, %v1099
  %1101 = vmatmul.f32.gmra.mxu0 %v978
  %v1102 = vpop.f32.mrf.mxu0
  %v1103 = vadd.f32 0.0, %v1102
  %1104 = vmatmul.f32.gmra.mxu0 %v981
  %v1105 = vpop.f32.mrf.mxu0
  %v1106 = vadd.f32 0.0, %v1105
  %1107 = vmatmul.f32.gmra.mxu0 %v984
  %v1108 = vpop.f32.mrf.mxu0
  %v1109 = vadd.f32 0.0, %v1108
  %1110 = vmatmul.f32.gmra.mxu0 %v987
  %v1111 = vpop.f32.mrf.mxu0
  %v1112 = vadd.f32 0.0, %v1111
  %1113 = vmatmul.f32.gmra.mxu0 %v990
  %v1114 = vpop.f32.mrf.mxu0
  %v1115 = vadd.f32 0.0, %v1114
  %1116 = vmatmul.f32.gmra.mxu0 %v993
  %v1117 = vpop.f32.mrf.mxu0
  %v1118 = vadd.f32 0.0, %v1117
  %1119 = vmatmul.f32.gmra.mxu0 %v996
  %v1120 = vpop.f32.mrf.mxu0
  %v1121 = vadd.f32 0.0, %v1120
  %1122 = vmatmul.f32.gmra.mxu0 %v999
  %v1123 = vpop.f32.mrf.mxu0
  %v1124 = vadd.f32 0.0, %v1123
  %1125 = vmatmul.f32.gmra.mxu0 %v1002
  %v1126 = vpop.f32.mrf.mxu0
  %v1127 = vadd.f32 0.0, %v1126
  %1128 = vmatmul.f32.gmra.mxu0 %v1005
  %v1129 = vpop.f32.mrf.mxu0
  %v1130 = vadd.f32 0.0, %v1129
  %1131 = vmatmul.f32.gmra.mxu0 %v1008
  %v1132 = vpop.f32.mrf.mxu0
  %v1133 = vadd.f32 0.0, %v1132
  %1134 = vmatmul.f32.gmra.mxu0 %v1011
  %v1135 = vpop.f32.mrf.mxu0
  %v1136 = vadd.f32 0.0, %v1135
  %1137 = vmatmul.f32.gmra.mxu0 %v1014
  %v1138 = vpop.f32.mrf.mxu0
  %v1139 = vadd.f32 0.0, %v1138
  %1140 = vmatmul.f32.gmra.mxu0 %v1017
  %v1141 = vpop.f32.mrf.mxu0
  %v1142 = vadd.f32 0.0, %v1141
  %1143 = vmatmul.f32.gmra.mxu0 %v1020
  %v1144 = vpop.f32.mrf.mxu0
  %v1145 = vadd.f32 0.0, %v1144
  %1146 = vmatmul.f32.gmra.mxu0 %v1023
  %v1147 = vpop.f32.mrf.mxu0
  %v1148 = vadd.f32 0.0, %v1147
  %1149 = vmatmul.f32.gmra.mxu0 %v1026
  %v1150 = vpop.f32.mrf.mxu0
  %v1151 = vadd.f32 0.0, %v1150
  %1152 = vmatmul.f32.gmra.mxu0 %v1029
  %v1153 = vpop.f32.mrf.mxu0
  %v1154 = vadd.f32 0.0, %v1153
  %1155 = vmatmul.f32.gmra.mxu0 %v1032
  %v1156 = vpop.f32.mrf.mxu0
  %v1157 = vadd.f32 0.0, %v1156
  %1158 = vmatmul.f32.gmra.mxu0 %v1035
  %v1159 = vpop.f32.mrf.mxu0
  %v1160 = vadd.f32 0.0, %v1159
  %1161 = vmatmul.f32.gmra.mxu0 %v1038
  %v1162 = vpop.f32.mrf.mxu0
  %v1163 = vadd.f32 0.0, %v1162
  %1164 = vmatmul.f32.gmra.mxu0 %v1041
  %v1165 = vpop.f32.mrf.mxu0
  %v1166 = vadd.f32 0.0, %v1165
  %1167 = vmatmul.f32.gmra.mxu0 %v1044
  %v1168 = vpop.f32.mrf.mxu0
  %v1169 = vadd.f32 0.0, %v1168
  %1170 = vmatmul.f32.gmra.mxu0 %v1047
  %v1171 = vpop.f32.mrf.mxu0
  %v1172 = vadd.f32 0.0, %v1171
  %1173 = vmatmul.f32.gmra.mxu0 %v1050
  %v1174 = vpop.f32.mrf.mxu0
  %v1175 = vadd.f32 0.0, %v1174
  %1176 = vmatmul.f32.gmra.mxu0 %v1053
  %v1177 = vpop.f32.mrf.mxu0
  %v1178 = vadd.f32 0.0, %v1177
  %1179 = vdwg.mxu0
  %v1180 = vmax.f32 %v875, %v1073
  %v1181 = vmax.f32 %v876, %v1076
  %v1182 = vmax.f32 %v877, %v1079
  %v1183 = vmax.f32 %v878, %v1082
  %v1184 = vmax.f32 %v879, %v1085
  %v1185 = vmax.f32 %v880, %v1088
  %v1186 = vmax.f32 %v881, %v1091
  %v1187 = vmax.f32 %v882, %v1094
  %v1188 = vmax.f32 %v883, %v1097
  %v1189 = vmax.f32 %v884, %v1100
  %v1190 = vmax.f32 %v885, %v1103
  %v1191 = vmax.f32 %v886, %v1106
  %v1192 = vmax.f32 %v887, %v1109
  %v1193 = vmax.f32 %v888, %v1112
  %v1194 = vmax.f32 %v889, %v1115
  %v1195 = vmax.f32 %v890, %v1118
  %v1196 = vmax.f32 %v891, %v1121
  %v1197 = vmax.f32 %v892, %v1124
  %v1198 = vmax.f32 %v893, %v1127
  %v1199 = vmax.f32 %v894, %v1130
  %v1200 = vmax.f32 %v895, %v1133
  %v1201 = vmax.f32 %v896, %v1136
  %v1202 = vmax.f32 %v897, %v1139
  %v1203 = vmax.f32 %v898, %v1142
  %v1204 = vmax.f32 %v899, %v1145
  %v1205 = vmax.f32 %v900, %v1148
  %v1206 = vmax.f32 %v901, %v1151
  %v1207 = vmax.f32 %v902, %v1154
  %v1208 = vmax.f32 %v903, %v1157
  %v1209 = vmax.f32 %v904, %v1160
  %v1210 = vmax.f32 %v905, %v1163
  %v1211 = vmax.f32 %v906, %v1166
  %v1212 = vmax.f32 %v907, %v1169
  %v1213 = vmax.f32 %v908, %v1172
  %v1214 = vmax.f32 %v909, %v1175
  %v1215 = vmax.f32 %v910, %v1178
  %v1216 = vld [vmem:[%s5] sm:$0x1]
  %v1218 = vperm.slane %v1216, 0
  %v1220 = vadd.f32 %v1180, %v1218
  %v1221 = vadd.f32 %v1181, %v1218
  %v1222 = vadd.f32 %v1182, %v1218
  %v1223 = vadd.f32 %v1183, %v1218
  %v1224 = vadd.f32 %v1184, %v1218
  %v1225 = vadd.f32 %v1185, %v1218
  %v1226 = vadd.f32 %v1186, %v1218
  %v1227 = vadd.f32 %v1187, %v1218
  %v1228 = vadd.f32 %v1188, %v1218
  %v1229 = vadd.f32 %v1189, %v1218
  %v1230 = vadd.f32 %v1190, %v1218
  %v1231 = vadd.f32 %v1191, %v1218
  %v1232 = vadd.f32 %v1192, %v1218
  %v1233 = vadd.f32 %v1193, %v1218
  %v1234 = vadd.f32 %v1194, %v1218
  %v1235 = vadd.f32 %v1195, %v1218
  %v1236 = vadd.f32 %v1196, %v1218
  %v1237 = vadd.f32 %v1197, %v1218
  %v1238 = vadd.f32 %v1198, %v1218
  %v1239 = vadd.f32 %v1199, %v1218
  %v1240 = vadd.f32 %v1200, %v1218
  %v1241 = vadd.f32 %v1201, %v1218
  %v1242 = vadd.f32 %v1202, %v1218
  %v1243 = vadd.f32 %v1203, %v1218
  %v1244 = vadd.f32 %v1204, %v1218
  %v1245 = vadd.f32 %v1205, %v1218
  %v1246 = vadd.f32 %v1206, %v1218
  %v1247 = vadd.f32 %v1207, %v1218
  %v1248 = vadd.f32 %v1208, %v1218
  %v1249 = vadd.f32 %v1209, %v1218
  %v1250 = vadd.f32 %v1210, %v1218
  %v1251 = vadd.f32 %v1211, %v1218
  %v1252 = vadd.f32 %v1212, %v1218
  %v1253 = vadd.f32 %v1213, %v1218
  %v1254 = vadd.f32 %v1214, %v1218
  %v1255 = vadd.f32 %v1215, %v1218
  %v1256 = vxor.u32 %v1220, 2147483648
  %v1257 = vxor.u32 %v1221, 2147483648
  %v1258 = vxor.u32 %v1222, 2147483648
  %v1259 = vxor.u32 %v1223, 2147483648
  %v1260 = vxor.u32 %v1224, 2147483648
  %v1261 = vxor.u32 %v1225, 2147483648
  %v1262 = vxor.u32 %v1226, 2147483648
  %v1263 = vxor.u32 %v1227, 2147483648
  %v1264 = vxor.u32 %v1228, 2147483648
  %v1265 = vxor.u32 %v1229, 2147483648
  %v1266 = vxor.u32 %v1230, 2147483648
  %v1267 = vxor.u32 %v1231, 2147483648
  %v1268 = vxor.u32 %v1232, 2147483648
  %v1269 = vxor.u32 %v1233, 2147483648
  %v1270 = vxor.u32 %v1234, 2147483648
  %v1271 = vxor.u32 %v1235, 2147483648
  %v1272 = vxor.u32 %v1236, 2147483648
  %v1273 = vxor.u32 %v1237, 2147483648
  %v1274 = vxor.u32 %v1238, 2147483648
  %v1275 = vxor.u32 %v1239, 2147483648
  %v1276 = vxor.u32 %v1240, 2147483648
  %v1277 = vxor.u32 %v1241, 2147483648
  %v1278 = vxor.u32 %v1242, 2147483648
  %v1279 = vxor.u32 %v1243, 2147483648
  %v1280 = vxor.u32 %v1244, 2147483648
  %v1281 = vxor.u32 %v1245, 2147483648
  %v1282 = vxor.u32 %v1246, 2147483648
  %v1283 = vxor.u32 %v1247, 2147483648
  %v1284 = vxor.u32 %v1248, 2147483648
  %v1285 = vxor.u32 %v1249, 2147483648
  %v1286 = vxor.u32 %v1250, 2147483648
  %v1287 = vxor.u32 %v1251, 2147483648
  %v1288 = vxor.u32 %v1252, 2147483648
  %v1289 = vxor.u32 %v1253, 2147483648
  %v1290 = vxor.u32 %v1254, 2147483648
  %v1291 = vxor.u32 %v1255, 2147483648
  %v1292 = vmul.f32 %v1256, 1.442695
  %v1293 = vpow.pop %v1292
  %v1294 = vmul.f32 %v1257, 1.442695
  %v1295 = vpow.pop %v1294
  %v1296 = vmul.f32 %v1258, 1.442695
  %v1297 = vpow.pop %v1296
  %v1298 = vmul.f32 %v1259, 1.442695
  %v1299 = vpow.pop %v1298
  %v1300 = vmul.f32 %v1260, 1.442695
  %v1301 = vpow.pop %v1300
  %v1302 = vmul.f32 %v1261, 1.442695
  %v1303 = vpow.pop %v1302
  %v1304 = vmul.f32 %v1262, 1.442695
  %v1305 = vpow.pop %v1304
  %v1306 = vmul.f32 %v1263, 1.442695
  %v1307 = vpow.pop %v1306
  %v1308 = vmul.f32 %v1264, 1.442695
  %v1309 = vpow.pop %v1308
  %v1310 = vmul.f32 %v1265, 1.442695
  %v1311 = vpow.pop %v1310
  %v1312 = vmul.f32 %v1266, 1.442695
  %v1313 = vpow.pop %v1312
  %v1314 = vmul.f32 %v1267, 1.442695
  %v1315 = vpow.pop %v1314
  %v1316 = vmul.f32 %v1268, 1.442695
  %v1317 = vpow.pop %v1316
  %v1318 = vmul.f32 %v1269, 1.442695
  %v1319 = vpow.pop %v1318
  %v1320 = vmul.f32 %v1270, 1.442695
  %v1321 = vpow.pop %v1320
  %v1322 = vmul.f32 %v1271, 1.442695
  %v1323 = vpow.pop %v1322
  %v1324 = vmul.f32 %v1272, 1.442695
  %v1325 = vpow.pop %v1324
  %v1326 = vmul.f32 %v1273, 1.442695
  %v1327 = vpow.pop %v1326
  %v1328 = vmul.f32 %v1274, 1.442695
  %v1329 = vpow.pop %v1328
  %v1330 = vmul.f32 %v1275, 1.442695
  %v1331 = vpow.pop %v1330
  %v1332 = vmul.f32 %v1276, 1.442695
  %v1333 = vpow.pop %v1332
  %v1334 = vmul.f32 %v1277, 1.442695
  %v1335 = vpow.pop %v1334
  %v1336 = vmul.f32 %v1278, 1.442695
  %v1337 = vpow.pop %v1336
  %v1338 = vmul.f32 %v1279, 1.442695
  %v1339 = vpow.pop %v1338
  %v1340 = vmul.f32 %v1280, 1.442695
  %v1341 = vpow.pop %v1340
  %v1342 = vmul.f32 %v1281, 1.442695
  %v1343 = vpow.pop %v1342
  %v1344 = vmul.f32 %v1282, 1.442695
  %v1345 = vpow.pop %v1344
  %v1346 = vmul.f32 %v1283, 1.442695
  %v1347 = vpow.pop %v1346
  %v1348 = vmul.f32 %v1284, 1.442695
  %v1349 = vpow.pop %v1348
  %v1350 = vmul.f32 %v1285, 1.442695
  %v1351 = vpow.pop %v1350
  %v1352 = vmul.f32 %v1286, 1.442695
  %v1353 = vpow.pop %v1352
  %v1354 = vmul.f32 %v1287, 1.442695
  %v1355 = vpow.pop %v1354
  %v1356 = vmul.f32 %v1288, 1.442695
  %v1357 = vpow.pop %v1356
  %v1358 = vmul.f32 %v1289, 1.442695
  %v1359 = vpow.pop %v1358
  %v1360 = vmul.f32 %v1290, 1.442695
  %v1361 = vpow.pop %v1360
  %v1362 = vmul.f32 %v1291, 1.442695
  %v1363 = vpow.pop %v1362
  %v1364 = vadd.f32 %v1293, 1.0
  %v1365 = vadd.f32 %v1295, 1.0
  %v1366 = vadd.f32 %v1297, 1.0
  %v1367 = vadd.f32 %v1299, 1.0
  %v1368 = vadd.f32 %v1301, 1.0
  %v1369 = vadd.f32 %v1303, 1.0
  %v1370 = vadd.f32 %v1305, 1.0
  %v1371 = vadd.f32 %v1307, 1.0
  %v1372 = vadd.f32 %v1309, 1.0
  %v1373 = vadd.f32 %v1311, 1.0
  %v1374 = vadd.f32 %v1313, 1.0
  %v1375 = vadd.f32 %v1315, 1.0
  %v1376 = vadd.f32 %v1317, 1.0
  %v1377 = vadd.f32 %v1319, 1.0
  %v1378 = vadd.f32 %v1321, 1.0
  %v1379 = vadd.f32 %v1323, 1.0
  %v1380 = vadd.f32 %v1325, 1.0
  %v1381 = vadd.f32 %v1327, 1.0
  %v1382 = vadd.f32 %v1329, 1.0
  %v1383 = vadd.f32 %v1331, 1.0
  %v1384 = vadd.f32 %v1333, 1.0
  %v1385 = vadd.f32 %v1335, 1.0
  %v1386 = vadd.f32 %v1337, 1.0
  %v1387 = vadd.f32 %v1339, 1.0
  %v1388 = vadd.f32 %v1341, 1.0
  %v1389 = vadd.f32 %v1343, 1.0
  %v1390 = vadd.f32 %v1345, 1.0
  %v1391 = vadd.f32 %v1347, 1.0
  %v1392 = vadd.f32 %v1349, 1.0
  %v1393 = vadd.f32 %v1351, 1.0
  %v1394 = vadd.f32 %v1353, 1.0
  %v1395 = vadd.f32 %v1355, 1.0
  %v1396 = vadd.f32 %v1357, 1.0
  %v1397 = vadd.f32 %v1359, 1.0
  %v1398 = vadd.f32 %v1361, 1.0
  %v1399 = vadd.f32 %v1363, 1.0
  %v1400 = vrcp.pop %v1364
  %v1401 = vmul.f32 %v1364, %v1400
  %v1402 = vsub.f32 1.0, %v1401
  %v1403 = vmul.f32 %v1400, %v1402
  %v1404 = vadd.f32 %v1400, %v1403
  %vm1405 = vweird.f32 %v1364
  %vm1406 = vweird.f32 %v1400
  %vm1407 = vmor %vm1405, %vm1406
  %v1408 = vsel %vm1407, %v1400, %v1404
  %v1409 = vand.u32 2147483647, %v1364
  %vm1410 = vcmp.eq.f32.partialorder %v1409, 8.507059e+37
  %v1411 = vand.u32 %v1364, 2147483648
  %v1412 = vor.u32 1.1754944e-38, %v1411
  %v1413 = vsel %vm1410, %v1412, %v1408
  %v1414 = vmul.f32 1.0, %v1413
  %v1415 = vrcp.pop %v1365
  %v1416 = vmul.f32 %v1365, %v1415
  %v1417 = vsub.f32 1.0, %v1416
  %v1418 = vmul.f32 %v1415, %v1417
  %v1419 = vadd.f32 %v1415, %v1418
  %vm1420 = vweird.f32 %v1365
  %vm1421 = vweird.f32 %v1415
  %vm1422 = vmor %vm1420, %vm1421
  %v1423 = vsel %vm1422, %v1415, %v1419
  %v1424 = vand.u32 2147483647, %v1365
  %vm1425 = vcmp.eq.f32.partialorder %v1424, 8.507059e+37
  %v1426 = vand.u32 %v1365, 2147483648
  %v1427 = vor.u32 1.1754944e-38, %v1426
  %v1428 = vsel %vm1425, %v1427, %v1423
  %v1429 = vmul.f32 1.0, %v1428
  %v1430 = vrcp.pop %v1366
  %v1431 = vmul.f32 %v1366, %v1430
  %v1432 = vsub.f32 1.0, %v1431
  %v1433 = vmul.f32 %v1430, %v1432
  %v1434 = vadd.f32 %v1430, %v1433
  %vm1435 = vweird.f32 %v1366
  %vm1436 = vweird.f32 %v1430
  %vm1437 = vmor %vm1435, %vm1436
  %v1438 = vsel %vm1437, %v1430, %v1434
  %v1439 = vand.u32 2147483647, %v1366
  %vm1440 = vcmp.eq.f32.partialorder %v1439, 8.507059e+37
  %v1441 = vand.u32 %v1366, 2147483648
  %v1442 = vor.u32 1.1754944e-38, %v1441
  %v1443 = vsel %vm1440, %v1442, %v1438
  %v1444 = vmul.f32 1.0, %v1443
  %v1445 = vrcp.pop %v1367
  %v1446 = vmul.f32 %v1367, %v1445
  %v1447 = vsub.f32 1.0, %v1446
  %v1448 = vmul.f32 %v1445, %v1447
  %v1449 = vadd.f32 %v1445, %v1448
  %vm1450 = vweird.f32 %v1367
  %vm1451 = vweird.f32 %v1445
  %vm1452 = vmor %vm1450, %vm1451
  %v1453 = vsel %vm1452, %v1445, %v1449
  %v1454 = vand.u32 2147483647, %v1367
  %vm1455 = vcmp.eq.f32.partialorder %v1454, 8.507059e+37
  %v1456 = vand.u32 %v1367, 2147483648
  %v1457 = vor.u32 1.1754944e-38, %v1456
  %v1458 = vsel %vm1455, %v1457, %v1453
  %v1459 = vmul.f32 1.0, %v1458
  %v1460 = vrcp.pop %v1368
  %v1461 = vmul.f32 %v1368, %v1460
  %v1462 = vsub.f32 1.0, %v1461
  %v1463 = vmul.f32 %v1460, %v1462
  %v1464 = vadd.f32 %v1460, %v1463
  %vm1465 = vweird.f32 %v1368
  %vm1466 = vweird.f32 %v1460
  %vm1467 = vmor %vm1465, %vm1466
  %v1468 = vsel %vm1467, %v1460, %v1464
  %v1469 = vand.u32 2147483647, %v1368
  %vm1470 = vcmp.eq.f32.partialorder %v1469, 8.507059e+37
  %v1471 = vand.u32 %v1368, 2147483648
  %v1472 = vor.u32 1.1754944e-38, %v1471
  %v1473 = vsel %vm1470, %v1472, %v1468
  %v1474 = vmul.f32 1.0, %v1473
  %v1475 = vrcp.pop %v1369
  %v1476 = vmul.f32 %v1369, %v1475
  %v1477 = vsub.f32 1.0, %v1476
  %v1478 = vmul.f32 %v1475, %v1477
  %v1479 = vadd.f32 %v1475, %v1478
  %vm1480 = vweird.f32 %v1369
  %vm1481 = vweird.f32 %v1475
  %vm1482 = vmor %vm1480, %vm1481
  %v1483 = vsel %vm1482, %v1475, %v1479
  %v1484 = vand.u32 2147483647, %v1369
  %vm1485 = vcmp.eq.f32.partialorder %v1484, 8.507059e+37
  %v1486 = vand.u32 %v1369, 2147483648
  %v1487 = vor.u32 1.1754944e-38, %v1486
  %v1488 = vsel %vm1485, %v1487, %v1483
  %v1489 = vmul.f32 1.0, %v1488
  %v1490 = vrcp.pop %v1370
  %v1491 = vmul.f32 %v1370, %v1490
  %v1492 = vsub.f32 1.0, %v1491
  %v1493 = vmul.f32 %v1490, %v1492
  %v1494 = vadd.f32 %v1490, %v1493
  %vm1495 = vweird.f32 %v1370
  %vm1496 = vweird.f32 %v1490
  %vm1497 = vmor %vm1495, %vm1496
  %v1498 = vsel %vm1497, %v1490, %v1494
  %v1499 = vand.u32 2147483647, %v1370
  %vm1500 = vcmp.eq.f32.partialorder %v1499, 8.507059e+37
  %v1501 = vand.u32 %v1370, 2147483648
  %v1502 = vor.u32 1.1754944e-38, %v1501
  %v1503 = vsel %vm1500, %v1502, %v1498
  %v1504 = vmul.f32 1.0, %v1503
  %v1505 = vrcp.pop %v1371
  %v1506 = vmul.f32 %v1371, %v1505
  %v1507 = vsub.f32 1.0, %v1506
  %v1508 = vmul.f32 %v1505, %v1507
  %v1509 = vadd.f32 %v1505, %v1508
  %vm1510 = vweird.f32 %v1371
  %vm1511 = vweird.f32 %v1505
  %vm1512 = vmor %vm1510, %vm1511
  %v1513 = vsel %vm1512, %v1505, %v1509
  %v1514 = vand.u32 2147483647, %v1371
  %vm1515 = vcmp.eq.f32.partialorder %v1514, 8.507059e+37
  %v1516 = vand.u32 %v1371, 2147483648
  %v1517 = vor.u32 1.1754944e-38, %v1516
  %v1518 = vsel %vm1515, %v1517, %v1513
  %v1519 = vmul.f32 1.0, %v1518
  %v1520 = vrcp.pop %v1372
  %v1521 = vmul.f32 %v1372, %v1520
  %v1522 = vsub.f32 1.0, %v1521
  %v1523 = vmul.f32 %v1520, %v1522
  %v1524 = vadd.f32 %v1520, %v1523
  %vm1525 = vweird.f32 %v1372
  %vm1526 = vweird.f32 %v1520
  %vm1527 = vmor %vm1525, %vm1526
  %v1528 = vsel %vm1527, %v1520, %v1524
  %v1529 = vand.u32 2147483647, %v1372
  %vm1530 = vcmp.eq.f32.partialorder %v1529, 8.507059e+37
  %v1531 = vand.u32 %v1372, 2147483648
  %v1532 = vor.u32 1.1754944e-38, %v1531
  %v1533 = vsel %vm1530, %v1532, %v1528
  %v1534 = vmul.f32 1.0, %v1533
  %v1535 = vrcp.pop %v1373
  %v1536 = vmul.f32 %v1373, %v1535
  %v1537 = vsub.f32 1.0, %v1536
  %v1538 = vmul.f32 %v1535, %v1537
  %v1539 = vadd.f32 %v1535, %v1538
  %vm1540 = vweird.f32 %v1373
  %vm1541 = vweird.f32 %v1535
  %vm1542 = vmor %vm1540, %vm1541
  %v1543 = vsel %vm1542, %v1535, %v1539
  %v1544 = vand.u32 2147483647, %v1373
  %vm1545 = vcmp.eq.f32.partialorder %v1544, 8.507059e+37
  %v1546 = vand.u32 %v1373, 2147483648
  %v1547 = vor.u32 1.1754944e-38, %v1546
  %v1548 = vsel %vm1545, %v1547, %v1543
  %v1549 = vmul.f32 1.0, %v1548
  %v1550 = vrcp.pop %v1374
  %v1551 = vmul.f32 %v1374, %v1550
  %v1552 = vsub.f32 1.0, %v1551
  %v1553 = vmul.f32 %v1550, %v1552
  %v1554 = vadd.f32 %v1550, %v1553
  %vm1555 = vweird.f32 %v1374
  %vm1556 = vweird.f32 %v1550
  %vm1557 = vmor %vm1555, %vm1556
  %v1558 = vsel %vm1557, %v1550, %v1554
  %v1559 = vand.u32 2147483647, %v1374
  %vm1560 = vcmp.eq.f32.partialorder %v1559, 8.507059e+37
  %v1561 = vand.u32 %v1374, 2147483648
  %v1562 = vor.u32 1.1754944e-38, %v1561
  %v1563 = vsel %vm1560, %v1562, %v1558
  %v1564 = vmul.f32 1.0, %v1563
  %v1565 = vrcp.pop %v1375
  %v1566 = vmul.f32 %v1375, %v1565
  %v1567 = vsub.f32 1.0, %v1566
  %v1568 = vmul.f32 %v1565, %v1567
  %v1569 = vadd.f32 %v1565, %v1568
  %vm1570 = vweird.f32 %v1375
  %vm1571 = vweird.f32 %v1565
  %vm1572 = vmor %vm1570, %vm1571
  %v1573 = vsel %vm1572, %v1565, %v1569
  %v1574 = vand.u32 2147483647, %v1375
  %vm1575 = vcmp.eq.f32.partialorder %v1574, 8.507059e+37
  %v1576 = vand.u32 %v1375, 2147483648
  %v1577 = vor.u32 1.1754944e-38, %v1576
  %v1578 = vsel %vm1575, %v1577, %v1573
  %v1579 = vmul.f32 1.0, %v1578
  %v1580 = vrcp.pop %v1376
  %v1581 = vmul.f32 %v1376, %v1580
  %v1582 = vsub.f32 1.0, %v1581
  %v1583 = vmul.f32 %v1580, %v1582
  %v1584 = vadd.f32 %v1580, %v1583
  %vm1585 = vweird.f32 %v1376
  %vm1586 = vweird.f32 %v1580
  %vm1587 = vmor %vm1585, %vm1586
  %v1588 = vsel %vm1587, %v1580, %v1584
  %v1589 = vand.u32 2147483647, %v1376
  %vm1590 = vcmp.eq.f32.partialorder %v1589, 8.507059e+37
  %v1591 = vand.u32 %v1376, 2147483648
  %v1592 = vor.u32 1.1754944e-38, %v1591
  %v1593 = vsel %vm1590, %v1592, %v1588
  %v1594 = vmul.f32 1.0, %v1593
  %v1595 = vrcp.pop %v1377
  %v1596 = vmul.f32 %v1377, %v1595
  %v1597 = vsub.f32 1.0, %v1596
  %v1598 = vmul.f32 %v1595, %v1597
  %v1599 = vadd.f32 %v1595, %v1598
  %vm1600 = vweird.f32 %v1377
  %vm1601 = vweird.f32 %v1595
  %vm1602 = vmor %vm1600, %vm1601
  %v1603 = vsel %vm1602, %v1595, %v1599
  %v1604 = vand.u32 2147483647, %v1377
  %vm1605 = vcmp.eq.f32.partialorder %v1604, 8.507059e+37
  %v1606 = vand.u32 %v1377, 2147483648
  %v1607 = vor.u32 1.1754944e-38, %v1606
  %v1608 = vsel %vm1605, %v1607, %v1603
  %v1609 = vmul.f32 1.0, %v1608
  %v1610 = vrcp.pop %v1378
  %v1611 = vmul.f32 %v1378, %v1610
  %v1612 = vsub.f32 1.0, %v1611
  %v1613 = vmul.f32 %v1610, %v1612
  %v1614 = vadd.f32 %v1610, %v1613
  %vm1615 = vweird.f32 %v1378
  %vm1616 = vweird.f32 %v1610
  %vm1617 = vmor %vm1615, %vm1616
  %v1618 = vsel %vm1617, %v1610, %v1614
  %v1619 = vand.u32 2147483647, %v1378
  %vm1620 = vcmp.eq.f32.partialorder %v1619, 8.507059e+37
  %v1621 = vand.u32 %v1378, 2147483648
  %v1622 = vor.u32 1.1754944e-38, %v1621
  %v1623 = vsel %vm1620, %v1622, %v1618
  %v1624 = vmul.f32 1.0, %v1623
  %v1625 = vrcp.pop %v1379
  %v1626 = vmul.f32 %v1379, %v1625
  %v1627 = vsub.f32 1.0, %v1626
  %v1628 = vmul.f32 %v1625, %v1627
  %v1629 = vadd.f32 %v1625, %v1628
  %vm1630 = vweird.f32 %v1379
  %vm1631 = vweird.f32 %v1625
  %vm1632 = vmor %vm1630, %vm1631
  %v1633 = vsel %vm1632, %v1625, %v1629
  %v1634 = vand.u32 2147483647, %v1379
  %vm1635 = vcmp.eq.f32.partialorder %v1634, 8.507059e+37
  %v1636 = vand.u32 %v1379, 2147483648
  %v1637 = vor.u32 1.1754944e-38, %v1636
  %v1638 = vsel %vm1635, %v1637, %v1633
  %v1639 = vmul.f32 1.0, %v1638
  %v1640 = vrcp.pop %v1380
  %v1641 = vmul.f32 %v1380, %v1640
  %v1642 = vsub.f32 1.0, %v1641
  %v1643 = vmul.f32 %v1640, %v1642
  %v1644 = vadd.f32 %v1640, %v1643
  %vm1645 = vweird.f32 %v1380
  %vm1646 = vweird.f32 %v1640
  %vm1647 = vmor %vm1645, %vm1646
  %v1648 = vsel %vm1647, %v1640, %v1644
  %v1649 = vand.u32 2147483647, %v1380
  %vm1650 = vcmp.eq.f32.partialorder %v1649, 8.507059e+37
  %v1651 = vand.u32 %v1380, 2147483648
  %v1652 = vor.u32 1.1754944e-38, %v1651
  %v1653 = vsel %vm1650, %v1652, %v1648
  %v1654 = vmul.f32 1.0, %v1653
  %v1655 = vrcp.pop %v1381
  %v1656 = vmul.f32 %v1381, %v1655
  %v1657 = vsub.f32 1.0, %v1656
  %v1658 = vmul.f32 %v1655, %v1657
  %v1659 = vadd.f32 %v1655, %v1658
  %vm1660 = vweird.f32 %v1381
  %vm1661 = vweird.f32 %v1655
  %vm1662 = vmor %vm1660, %vm1661
  %v1663 = vsel %vm1662, %v1655, %v1659
  %v1664 = vand.u32 2147483647, %v1381
  %vm1665 = vcmp.eq.f32.partialorder %v1664, 8.507059e+37
  %v1666 = vand.u32 %v1381, 2147483648
  %v1667 = vor.u32 1.1754944e-38, %v1666
  %v1668 = vsel %vm1665, %v1667, %v1663
  %v1669 = vmul.f32 1.0, %v1668
  %v1670 = vrcp.pop %v1382
  %v1671 = vmul.f32 %v1382, %v1670
  %v1672 = vsub.f32 1.0, %v1671
  %v1673 = vmul.f32 %v1670, %v1672
  %v1674 = vadd.f32 %v1670, %v1673
  %vm1675 = vweird.f32 %v1382
  %vm1676 = vweird.f32 %v1670
  %vm1677 = vmor %vm1675, %vm1676
  %v1678 = vsel %vm1677, %v1670, %v1674
  %v1679 = vand.u32 2147483647, %v1382
  %vm1680 = vcmp.eq.f32.partialorder %v1679, 8.507059e+37
  %v1681 = vand.u32 %v1382, 2147483648
  %v1682 = vor.u32 1.1754944e-38, %v1681
  %v1683 = vsel %vm1680, %v1682, %v1678
  %v1684 = vmul.f32 1.0, %v1683
  %v1685 = vrcp.pop %v1383
  %v1686 = vmul.f32 %v1383, %v1685
  %v1687 = vsub.f32 1.0, %v1686
  %v1688 = vmul.f32 %v1685, %v1687
  %v1689 = vadd.f32 %v1685, %v1688
  %vm1690 = vweird.f32 %v1383
  %vm1691 = vweird.f32 %v1685
  %vm1692 = vmor %vm1690, %vm1691
  %v1693 = vsel %vm1692, %v1685, %v1689
  %v1694 = vand.u32 2147483647, %v1383
  %vm1695 = vcmp.eq.f32.partialorder %v1694, 8.507059e+37
  %v1696 = vand.u32 %v1383, 2147483648
  %v1697 = vor.u32 1.1754944e-38, %v1696
  %v1698 = vsel %vm1695, %v1697, %v1693
  %v1699 = vmul.f32 1.0, %v1698
  %v1700 = vrcp.pop %v1384
  %v1701 = vmul.f32 %v1384, %v1700
  %v1702 = vsub.f32 1.0, %v1701
  %v1703 = vmul.f32 %v1700, %v1702
  %v1704 = vadd.f32 %v1700, %v1703
  %vm1705 = vweird.f32 %v1384
  %vm1706 = vweird.f32 %v1700
  %vm1707 = vmor %vm1705, %vm1706
  %v1708 = vsel %vm1707, %v1700, %v1704
  %v1709 = vand.u32 2147483647, %v1384
  %vm1710 = vcmp.eq.f32.partialorder %v1709, 8.507059e+37
  %v1711 = vand.u32 %v1384, 2147483648
  %v1712 = vor.u32 1.1754944e-38, %v1711
  %v1713 = vsel %vm1710, %v1712, %v1708
  %v1714 = vmul.f32 1.0, %v1713
  %v1715 = vrcp.pop %v1385
  %v1716 = vmul.f32 %v1385, %v1715
  %v1717 = vsub.f32 1.0, %v1716
  %v1718 = vmul.f32 %v1715, %v1717
  %v1719 = vadd.f32 %v1715, %v1718
  %vm1720 = vweird.f32 %v1385
  %vm1721 = vweird.f32 %v1715
  %vm1722 = vmor %vm1720, %vm1721
  %v1723 = vsel %vm1722, %v1715, %v1719
  %v1724 = vand.u32 2147483647, %v1385
  %vm1725 = vcmp.eq.f32.partialorder %v1724, 8.507059e+37
  %v1726 = vand.u32 %v1385, 2147483648
  %v1727 = vor.u32 1.1754944e-38, %v1726
  %v1728 = vsel %vm1725, %v1727, %v1723
  %v1729 = vmul.f32 1.0, %v1728
  %v1730 = vrcp.pop %v1386
  %v1731 = vmul.f32 %v1386, %v1730
  %v1732 = vsub.f32 1.0, %v1731
  %v1733 = vmul.f32 %v1730, %v1732
  %v1734 = vadd.f32 %v1730, %v1733
  %vm1735 = vweird.f32 %v1386
  %vm1736 = vweird.f32 %v1730
  %vm1737 = vmor %vm1735, %vm1736
  %v1738 = vsel %vm1737, %v1730, %v1734
  %v1739 = vand.u32 2147483647, %v1386
  %vm1740 = vcmp.eq.f32.partialorder %v1739, 8.507059e+37
  %v1741 = vand.u32 %v1386, 2147483648
  %v1742 = vor.u32 1.1754944e-38, %v1741
  %v1743 = vsel %vm1740, %v1742, %v1738
  %v1744 = vmul.f32 1.0, %v1743
  %v1745 = vrcp.pop %v1387
  %v1746 = vmul.f32 %v1387, %v1745
  %v1747 = vsub.f32 1.0, %v1746
  %v1748 = vmul.f32 %v1745, %v1747
  %v1749 = vadd.f32 %v1745, %v1748
  %vm1750 = vweird.f32 %v1387
  %vm1751 = vweird.f32 %v1745
  %vm1752 = vmor %vm1750, %vm1751
  %v1753 = vsel %vm1752, %v1745, %v1749
  %v1754 = vand.u32 2147483647, %v1387
  %vm1755 = vcmp.eq.f32.partialorder %v1754, 8.507059e+37
  %v1756 = vand.u32 %v1387, 2147483648
  %v1757 = vor.u32 1.1754944e-38, %v1756
  %v1758 = vsel %vm1755, %v1757, %v1753
  %v1759 = vmul.f32 1.0, %v1758
  %v1760 = vrcp.pop %v1388
  %v1761 = vmul.f32 %v1388, %v1760
  %v1762 = vsub.f32 1.0, %v1761
  %v1763 = vmul.f32 %v1760, %v1762
  %v1764 = vadd.f32 %v1760, %v1763
  %vm1765 = vweird.f32 %v1388
  %vm1766 = vweird.f32 %v1760
  %vm1767 = vmor %vm1765, %vm1766
  %v1768 = vsel %vm1767, %v1760, %v1764
  %v1769 = vand.u32 2147483647, %v1388
  %vm1770 = vcmp.eq.f32.partialorder %v1769, 8.507059e+37
  %v1771 = vand.u32 %v1388, 2147483648
  %v1772 = vor.u32 1.1754944e-38, %v1771
  %v1773 = vsel %vm1770, %v1772, %v1768
  %v1774 = vmul.f32 1.0, %v1773
  %v1775 = vrcp.pop %v1389
  %v1776 = vmul.f32 %v1389, %v1775
  %v1777 = vsub.f32 1.0, %v1776
  %v1778 = vmul.f32 %v1775, %v1777
  %v1779 = vadd.f32 %v1775, %v1778
  %vm1780 = vweird.f32 %v1389
  %vm1781 = vweird.f32 %v1775
  %vm1782 = vmor %vm1780, %vm1781
  %v1783 = vsel %vm1782, %v1775, %v1779
  %v1784 = vand.u32 2147483647, %v1389
  %vm1785 = vcmp.eq.f32.partialorder %v1784, 8.507059e+37
  %v1786 = vand.u32 %v1389, 2147483648
  %v1787 = vor.u32 1.1754944e-38, %v1786
  %v1788 = vsel %vm1785, %v1787, %v1783
  %v1789 = vmul.f32 1.0, %v1788
  %v1790 = vrcp.pop %v1390
  %v1791 = vmul.f32 %v1390, %v1790
  %v1792 = vsub.f32 1.0, %v1791
  %v1793 = vmul.f32 %v1790, %v1792
  %v1794 = vadd.f32 %v1790, %v1793
  %vm1795 = vweird.f32 %v1390
  %vm1796 = vweird.f32 %v1790
  %vm1797 = vmor %vm1795, %vm1796
  %v1798 = vsel %vm1797, %v1790, %v1794
  %v1799 = vand.u32 2147483647, %v1390
  %vm1800 = vcmp.eq.f32.partialorder %v1799, 8.507059e+37
  %v1801 = vand.u32 %v1390, 2147483648
  %v1802 = vor.u32 1.1754944e-38, %v1801
  %v1803 = vsel %vm1800, %v1802, %v1798
  %v1804 = vmul.f32 1.0, %v1803
  %v1805 = vrcp.pop %v1391
  %v1806 = vmul.f32 %v1391, %v1805
  %v1807 = vsub.f32 1.0, %v1806
  %v1808 = vmul.f32 %v1805, %v1807
  %v1809 = vadd.f32 %v1805, %v1808
  %vm1810 = vweird.f32 %v1391
  %vm1811 = vweird.f32 %v1805
  %vm1812 = vmor %vm1810, %vm1811
  %v1813 = vsel %vm1812, %v1805, %v1809
  %v1814 = vand.u32 2147483647, %v1391
  %vm1815 = vcmp.eq.f32.partialorder %v1814, 8.507059e+37
  %v1816 = vand.u32 %v1391, 2147483648
  %v1817 = vor.u32 1.1754944e-38, %v1816
  %v1818 = vsel %vm1815, %v1817, %v1813
  %v1819 = vmul.f32 1.0, %v1818
  %v1820 = vrcp.pop %v1392
  %v1821 = vmul.f32 %v1392, %v1820
  %v1822 = vsub.f32 1.0, %v1821
  %v1823 = vmul.f32 %v1820, %v1822
  %v1824 = vadd.f32 %v1820, %v1823
  %vm1825 = vweird.f32 %v1392
  %vm1826 = vweird.f32 %v1820
  %vm1827 = vmor %vm1825, %vm1826
  %v1828 = vsel %vm1827, %v1820, %v1824
  %v1829 = vand.u32 2147483647, %v1392
  %vm1830 = vcmp.eq.f32.partialorder %v1829, 8.507059e+37
  %v1831 = vand.u32 %v1392, 2147483648
  %v1832 = vor.u32 1.1754944e-38, %v1831
  %v1833 = vsel %vm1830, %v1832, %v1828
  %v1834 = vmul.f32 1.0, %v1833
  %v1835 = vrcp.pop %v1393
  %v1836 = vmul.f32 %v1393, %v1835
  %v1837 = vsub.f32 1.0, %v1836
  %v1838 = vmul.f32 %v1835, %v1837
  %v1839 = vadd.f32 %v1835, %v1838
  %vm1840 = vweird.f32 %v1393
  %vm1841 = vweird.f32 %v1835
  %vm1842 = vmor %vm1840, %vm1841
  %v1843 = vsel %vm1842, %v1835, %v1839
  %v1844 = vand.u32 2147483647, %v1393
  %vm1845 = vcmp.eq.f32.partialorder %v1844, 8.507059e+37
  %v1846 = vand.u32 %v1393, 2147483648
  %v1847 = vor.u32 1.1754944e-38, %v1846
  %v1848 = vsel %vm1845, %v1847, %v1843
  %v1849 = vmul.f32 1.0, %v1848
  %v1850 = vrcp.pop %v1394
  %v1851 = vmul.f32 %v1394, %v1850
  %v1852 = vsub.f32 1.0, %v1851
  %v1853 = vmul.f32 %v1850, %v1852
  %v1854 = vadd.f32 %v1850, %v1853
  %vm1855 = vweird.f32 %v1394
  %vm1856 = vweird.f32 %v1850
  %vm1857 = vmor %vm1855, %vm1856
  %v1858 = vsel %vm1857, %v1850, %v1854
  %v1859 = vand.u32 2147483647, %v1394
  %vm1860 = vcmp.eq.f32.partialorder %v1859, 8.507059e+37
  %v1861 = vand.u32 %v1394, 2147483648
  %v1862 = vor.u32 1.1754944e-38, %v1861
  %v1863 = vsel %vm1860, %v1862, %v1858
  %v1864 = vmul.f32 1.0, %v1863
  %v1865 = vrcp.pop %v1395
  %v1866 = vmul.f32 %v1395, %v1865
  %v1867 = vsub.f32 1.0, %v1866
  %v1868 = vmul.f32 %v1865, %v1867
  %v1869 = vadd.f32 %v1865, %v1868
  %vm1870 = vweird.f32 %v1395
  %vm1871 = vweird.f32 %v1865
  %vm1872 = vmor %vm1870, %vm1871
  %v1873 = vsel %vm1872, %v1865, %v1869
  %v1874 = vand.u32 2147483647, %v1395
  %vm1875 = vcmp.eq.f32.partialorder %v1874, 8.507059e+37
  %v1876 = vand.u32 %v1395, 2147483648
  %v1877 = vor.u32 1.1754944e-38, %v1876
  %v1878 = vsel %vm1875, %v1877, %v1873
  %v1879 = vmul.f32 1.0, %v1878
  %v1880 = vrcp.pop %v1396
  %v1881 = vmul.f32 %v1396, %v1880
  %v1882 = vsub.f32 1.0, %v1881
  %v1883 = vmul.f32 %v1880, %v1882
  %v1884 = vadd.f32 %v1880, %v1883
  %vm1885 = vweird.f32 %v1396
  %vm1886 = vweird.f32 %v1880
  %vm1887 = vmor %vm1885, %vm1886
  %v1888 = vsel %vm1887, %v1880, %v1884
  %v1889 = vand.u32 2147483647, %v1396
  %vm1890 = vcmp.eq.f32.partialorder %v1889, 8.507059e+37
  %v1891 = vand.u32 %v1396, 2147483648
  %v1892 = vor.u32 1.1754944e-38, %v1891
  %v1893 = vsel %vm1890, %v1892, %v1888
  %v1894 = vmul.f32 1.0, %v1893
  %v1895 = vrcp.pop %v1397
  %v1896 = vmul.f32 %v1397, %v1895
  %v1897 = vsub.f32 1.0, %v1896
  %v1898 = vmul.f32 %v1895, %v1897
  %v1899 = vadd.f32 %v1895, %v1898
  %vm1900 = vweird.f32 %v1397
  %vm1901 = vweird.f32 %v1895
  %vm1902 = vmor %vm1900, %vm1901
  %v1903 = vsel %vm1902, %v1895, %v1899
  %v1904 = vand.u32 2147483647, %v1397
  %vm1905 = vcmp.eq.f32.partialorder %v1904, 8.507059e+37
  %v1906 = vand.u32 %v1397, 2147483648
  %v1907 = vor.u32 1.1754944e-38, %v1906
  %v1908 = vsel %vm1905, %v1907, %v1903
  %v1909 = vmul.f32 1.0, %v1908
  %v1910 = vrcp.pop %v1398
  %v1911 = vmul.f32 %v1398, %v1910
  %v1912 = vsub.f32 1.0, %v1911
  %v1913 = vmul.f32 %v1910, %v1912
  %v1914 = vadd.f32 %v1910, %v1913
  %vm1915 = vweird.f32 %v1398
  %vm1916 = vweird.f32 %v1910
  %vm1917 = vmor %vm1915, %vm1916
  %v1918 = vsel %vm1917, %v1910, %v1914
  %v1919 = vand.u32 2147483647, %v1398
  %vm1920 = vcmp.eq.f32.partialorder %v1919, 8.507059e+37
  %v1921 = vand.u32 %v1398, 2147483648
  %v1922 = vor.u32 1.1754944e-38, %v1921
  %v1923 = vsel %vm1920, %v1922, %v1918
  %v1924 = vmul.f32 1.0, %v1923
  %v1925 = vrcp.pop %v1399
  %v1926 = vmul.f32 %v1399, %v1925
  %v1927 = vsub.f32 1.0, %v1926
  %v1928 = vmul.f32 %v1925, %v1927
  %v1929 = vadd.f32 %v1925, %v1928
  %vm1930 = vweird.f32 %v1399
  %vm1931 = vweird.f32 %v1925
  %vm1932 = vmor %vm1930, %vm1931
  %v1933 = vsel %vm1932, %v1925, %v1929
  %v1934 = vand.u32 2147483647, %v1399
  %vm1935 = vcmp.eq.f32.partialorder %v1934, 8.507059e+37
  %v1936 = vand.u32 %v1399, 2147483648
  %v1937 = vor.u32 1.1754944e-38, %v1936
  %v1938 = vsel %vm1935, %v1937, %v1933
  %v1939 = vmul.f32 1.0, %v1938
  %vm1940 = vcmask 48128
  %1941 = vst.msk [vmem:[%s6] sm:$0xff] %vm1940, %v1414
  %1942 = vst.msk [vmem:[%s6 + $0x8] sm:$0xff] %vm1940, %v1429
  %1943 = vst.msk [vmem:[%s6 + $0x10] sm:$0xff] %vm1940, %v1444
  %1944 = vst.msk [vmem:[%s6 + $0x18] sm:$0xff] %vm1940, %v1459
  %1945 = vst.msk [vmem:[%s6 + $0x20] sm:$0xff] %vm1940, %v1474
  %1946 = vst.msk [vmem:[%s6 + $0x28] sm:$0xff] %vm1940, %v1489
  %1947 = vst.msk [vmem:[%s6 + $0x30] sm:$0xff] %vm1940, %v1504
  %1948 = vst.msk [vmem:[%s6 + $0x38] sm:$0xff] %vm1940, %v1519
  %1949 = vst.msk [vmem:[%s6 + $0x40] sm:$0xff] %vm1940, %v1534
  %1950 = vst.msk [vmem:[%s6 + $0x48] sm:$0xff] %vm1940, %v1549
  %1951 = vst.msk [vmem:[%s6 + $0x50] sm:$0xff] %vm1940, %v1564
  %1952 = vst.msk [vmem:[%s6 + $0x58] sm:$0xff] %vm1940, %v1579
  %1953 = vst.msk [vmem:[%s6 + $0x60] sm:$0xff] %vm1940, %v1594
  %1954 = vst.msk [vmem:[%s6 + $0x68] sm:$0xff] %vm1940, %v1609
  %1955 = vst.msk [vmem:[%s6 + $0x70] sm:$0xff] %vm1940, %v1624
  %1956 = vst.msk [vmem:[%s6 + $0x78] sm:$0xff] %vm1940, %v1639
  %1957 = vst.msk [vmem:[%s6 + $0x80] sm:$0xff] %vm1940, %v1654
  %1958 = vst.msk [vmem:[%s6 + $0x88] sm:$0xff] %vm1940, %v1669
  %1959 = vst.msk [vmem:[%s6 + $0x90] sm:$0xff] %vm1940, %v1684
  %1960 = vst.msk [vmem:[%s6 + $0x98] sm:$0xff] %vm1940, %v1699
  %1961 = vst.msk [vmem:[%s6 + $0xa0] sm:$0xff] %vm1940, %v1714
  %1962 = vst.msk [vmem:[%s6 + $0xa8] sm:$0xff] %vm1940, %v1729
  %1963 = vst.msk [vmem:[%s6 + $0xb0] sm:$0xff] %vm1940, %v1744
  %1964 = vst.msk [vmem:[%s6 + $0xb8] sm:$0xff] %vm1940, %v1759
  %1965 = vst.msk [vmem:[%s6 + $0xc0] sm:$0xff] %vm1940, %v1774
  %1966 = vst.msk [vmem:[%s6 + $0xc8] sm:$0xff] %vm1940, %v1789
  %1967 = vst.msk [vmem:[%s6 + $0xd0] sm:$0xff] %vm1940, %v1804
  %1968 = vst.msk [vmem:[%s6 + $0xd8] sm:$0xff] %vm1940, %v1819
  %1969 = vst.msk [vmem:[%s6 + $0xe0] sm:$0xff] %vm1940, %v1834
  %1970 = vst.msk [vmem:[%s6 + $0xe8] sm:$0xff] %vm1940, %v1849
  %1971 = vst.msk [vmem:[%s6 + $0xf0] sm:$0xff] %vm1940, %v1864
  %1972 = vst.msk [vmem:[%s6 + $0xf8] sm:$0xff] %vm1940, %v1879
  %1973 = vst.msk [vmem:[%s6 + $0x100] sm:$0xff] %vm1940, %v1894
  %1974 = vst.msk [vmem:[%s6 + $0x108] sm:$0xff] %vm1940, %v1909
  %1975 = vst.msk [vmem:[%s6 + $0x110] sm:$0xff] %vm1940, %v1924
  %1976 = vst.msk [vmem:[%s6 + $0x118] sm:$0xff] %vm1940, %v1939
  // Predicated region
  $region26: #{lenet_forward.3} parent=0 // pred_check
    _
  $region27: #{lenet_forward.3} parent=0 // pred_check_branch
    %1978 = sbr.rel (0) target = $region29
  $region28: #{lenet_forward.3} parent=0 // pred_region
    _
  $region29: #{lenet_forward.3} parent=0 // pred_fallthru
    _
  // Predicated region
  $region30: #{lenet_forward.3} parent=0 // pred_check
    _
  $region31: #{lenet_forward.3} parent=0 // pred_check_branch
    %1980 = sbr.rel (0) target = $region33
  $region32: #{lenet_forward.3} parent=0 // pred_region
    _
  $region33: #{lenet_forward.3} parent=0 // pred_fallthru
    _

// kernel: lenet_forward.4
$region0: #{lenet_forward.4}
  #allocation0 [shape = 'u32[]', space=smem, size = 0x4, offset = 0x4, fixed_abs, tag = 'smem constant byte address 0x4 - core index']
  #allocation1 [shape = 'u32[72,128]{1,0:T(1,128)}', space=vmem, size = 0x9000, scoped, tag = 'internal scratch']
  %s0 = inlined_call_operand.vmem [shape: f32[32,150], index: 0, kind: input, shape index: {}]
  %s1 = inlined_call_operand.vmem [shape: f32[32,150], index: 1, kind: input, shape index: {}]
  %s2 = inlined_call_operand.vmem [shape: f32[32,150], index: 2, kind: input, shape index: {}]
  %s3 = inlined_call_operand.vmem [shape: f32[32,150], index: 3, kind: input, shape index: {}]
  %s4 = inlined_call_operand.vmem [shape: f32[150,16], index: 4, kind: input, shape index: {}]
  %s5 = inlined_call_operand.vmem [shape: f32[1,16], index: 5, kind: input, shape index: {}]
  %s6 = inlined_call_operand.vmem [shape: f32[32,16], index: 6, kind: output, shape index: {}]
  %s7 = sld [smem:[#allocation0]]
  $region34: #{lenet_forward.4} parent=0
    _
  %s9 = ssub.s32 1, %s7
  %s10 = scalar_select 0, %s9, %s7
  // Predicated region
  $region2: #{lenet_forward.4} parent=0 // pred_check
    _
  $region3: #{lenet_forward.4} parent=0 // pred_check_branch
    %12 = sbr.rel (0) target = $region5
  $region4: #{lenet_forward.4} parent=0 // pred_region
    _
  $region5: #{lenet_forward.4} parent=0 // pred_fallthru
    _
  // Predicated region
  $region6: #{lenet_forward.4} parent=0 // pred_check
    _
  $region7: #{lenet_forward.4} parent=0 // pred_check_branch
    %14 = sbr.rel (0) target = $region9
  $region8: #{lenet_forward.4} parent=0 // pred_region
    _
  $region9: #{lenet_forward.4} parent=0 // pred_fallthru
    _
  // Predicated region
  $region10: #{lenet_forward.4} parent=0 // pred_check
    _
  $region11: #{lenet_forward.4} parent=0 // pred_check_branch
    %16 = sbr.rel (0) target = $region13
  $region12: #{lenet_forward.4} parent=0 // pred_region
    _
  $region13: #{lenet_forward.4} parent=0 // pred_fallthru
    _
  // Predicated region
  $region14: #{lenet_forward.4} parent=0 // pred_check
    _
  $region15: #{lenet_forward.4} parent=0 // pred_check_branch
    %18 = sbr.rel (0) target = $region17
  $region16: #{lenet_forward.4} parent=0 // pred_region
    _
  $region17: #{lenet_forward.4} parent=0 // pred_fallthru
    _
  // Predicated region
  $region18: #{lenet_forward.4} parent=0 // pred_check
    _
  $region19: #{lenet_forward.4} parent=0 // pred_check_branch
    %20 = sbr.rel (0) target = $region21
  $region20: #{lenet_forward.4} parent=0 // pred_region
    _
  $region21: #{lenet_forward.4} parent=0 // pred_fallthru
    _
  // Predicated region
  $region22: #{lenet_forward.4} parent=0 // pred_check
    _
  $region23: #{lenet_forward.4} parent=0 // pred_check_branch
    %22 = sbr.rel (0) target = $region25
  $region24: #{lenet_forward.4} parent=0 // pred_region
    _
  $region25: #{lenet_forward.4} parent=0 // pred_fallthru
    _
  %v23 = vld [vmem:[%s4] sm:$0xff]
  %v24 = vld [vmem:[%s4 + $0x8] sm:$0xff]
  %v25 = vld [vmem:[%s4 + $0x10] sm:$0xff]
  %v26 = vld [vmem:[%s4 + $0x18] sm:$0xff]
  %v27 = vld [vmem:[%s4 + $0x20] sm:$0xff]
  %v28 = vld [vmem:[%s4 + $0x28] sm:$0xff]
  %v29 = vld [vmem:[%s4 + $0x30] sm:$0xff]
  %v30 = vld [vmem:[%s4 + $0x38] sm:$0xff]
  %v31 = vld [vmem:[%s4 + $0x40] sm:$0xff]
  %v32 = vld [vmem:[%s4 + $0x48] sm:$0xff]
  %v33 = vld [vmem:[%s4 + $0x50] sm:$0xff]
  %v34 = vld [vmem:[%s4 + $0x58] sm:$0xff]
  %v35 = vld [vmem:[%s4 + $0x60] sm:$0xff]
  %v36 = vld [vmem:[%s4 + $0x68] sm:$0xff]
  %v37 = vld [vmem:[%s4 + $0x70] sm:$0xff]
  %v38 = vld [vmem:[%s4 + $0x78] sm:$0xff]
  %v39 = vld [vmem:[%s4 + $0x80] sm:$0xff]
  %v40 = vld [vmem:[%s4 + $0x88] sm:$0xff]
  %v41 = vld [vmem:[%s4 + $0x90] sm:$0x3f]
  %v42 = vld [vmem:[%s0] sm:$0xff]
  %v43 = vld [vmem:[%s0 + $0x8] sm:$0xff]
  %v44 = vld [vmem:[%s0 + $0x10] sm:$0xff]
  %v45 = vld [vmem:[%s0 + $0x18] sm:$0xff]
  %v46 = vld [vmem:[%s0 + $0x20] sm:$0xff]
  %v47 = vld [vmem:[%s0 + $0x28] sm:$0xff]
  %v48 = vld [vmem:[%s0 + $0x30] sm:$0xff]
  %v49 = vld [vmem:[%s0 + $0x38] sm:$0xff]
  %vm50 = vcmask 179200
  %v52 = vsel %vm50, %v43, 0
  %v55 = vsel %vm50, %v45, 0
  %v58 = vsel %vm50, %v47, 0
  %v61 = vsel %vm50, %v49, 0
  %vm63 = vcmask 1045504
  %v65 = vsel %vm63, %v41, 0
  %67 = vmatpush.msra.mxu0 %v38
  %68 = vmatpush.msra.mxu0 %v37
  %69 = vmatpush.msra.mxu0 %v36
  %70 = vmatpush.msra.mxu0 %v35
  %71 = vmatpush.msra.mxu0 %v34
  %72 = vmatpush.msra.mxu0 %v33
  %73 = vmatpush.msra.mxu0 %v32
  %74 = vmatpush.msra.mxu0 %v31
  %75 = vmatpush.msra.mxu0 %v30
  %76 = vmatpush.msra.mxu0 %v29
  %77 = vmatpush.msra.mxu0 %v28
  %78 = vmatpush.msra.mxu0 %v27
  %79 = vmatpush.msra.mxu0 %v26
  %80 = vmatpush.msra.mxu0 %v25
  %81 = vmatpush.msra.mxu0 %v24
  %82 = vmatpush.msra.mxu0 %v23
  %83 = vmatmul.f32.gmra.mxu0 %v42
  %v84 = vpop.f32.mrf.mxu0
  %v85 = vadd.f32 0.0, %v84
  %86 = vmatmul.f32.gmra.mxu0 %v44
  %v87 = vpop.f32.mrf.mxu0
  %v88 = vadd.f32 0.0, %v87
  %89 = vmatmul.f32.gmra.mxu0 %v46
  %v90 = vpop.f32.mrf.mxu0
  %v91 = vadd.f32 0.0, %v90
  %92 = vmatmul.f32.gmra.mxu0 %v48
  %v93 = vpop.f32.mrf.mxu0
  %v94 = vadd.f32 0.0, %v93
  %95 = vdwg.mxu0
  %96 = vmatpush.msra.mxu0 0.0
  %97 = vmatpush.msra.mxu0 0.0
  %98 = vmatpush.msra.mxu0 0.0
  %99 = vmatpush.msra.mxu0 0.0
  %100 = vmatpush.msra.mxu0 0.0
  %101 = vmatpush.msra.mxu0 0.0
  %102 = vmatpush.msra.mxu0 0.0
  %103 = vmatpush.msra.mxu0 0.0
  %104 = vmatpush.msra.mxu0 0.0
  %105 = vmatpush.msra.mxu0 0.0
  %106 = vmatpush.msra.mxu0 0.0
  %107 = vmatpush.msra.mxu0 0.0
  %108 = vmatpush.msra.mxu0 0.0
  %109 = vmatpush.msra.mxu0 %v65
  %110 = vmatpush.msra.mxu0 %v40
  %111 = vmatpush.msra.mxu0 %v39
  %112 = vmatmul.f32.gmra.mxu0 %v52
  %v113 = vpop.f32.mrf.mxu0
  %v114 = vadd.f32 %v85, %v113
  %115 = vmatmul.f32.gmra.mxu0 %v55
  %v116 = vpop.f32.mrf.mxu0
  %v117 = vadd.f32 %v88, %v116
  %118 = vmatmul.f32.gmra.mxu0 %v58
  %v119 = vpop.f32.mrf.mxu0
  %v120 = vadd.f32 %v91, %v119
  %121 = vmatmul.f32.gmra.mxu0 %v61
  %v122 = vpop.f32.mrf.mxu0
  %v123 = vadd.f32 %v94, %v122
  %124 = vdwg.mxu0
  %v125 = vld [vmem:[%s1] sm:$0xff]
  %v126 = vld [vmem:[%s1 + $0x8] sm:$0xff]
  %v127 = vld [vmem:[%s1 + $0x10] sm:$0xff]
  %v128 = vld [vmem:[%s1 + $0x18] sm:$0xff]
  %v129 = vld [vmem:[%s1 + $0x20] sm:$0xff]
  %v130 = vld [vmem:[%s1 + $0x28] sm:$0xff]
  %v131 = vld [vmem:[%s1 + $0x30] sm:$0xff]
  %v132 = vld [vmem:[%s1 + $0x38] sm:$0xff]
  %v134 = vsel %vm50, %v126, 0
  %v137 = vsel %vm50, %v128, 0
  %v140 = vsel %vm50, %v130, 0
  %v143 = vsel %vm50, %v132, 0
  %145 = vmatpush.msra.mxu0 %v38
  %146 = vmatpush.msra.mxu0 %v37
  %147 = vmatpush.msra.mxu0 %v36
  %148 = vmatpush.msra.mxu0 %v35
  %149 = vmatpush.msra.mxu0 %v34
  %150 = vmatpush.msra.mxu0 %v33
  %151 = vmatpush.msra.mxu0 %v32
  %152 = vmatpush.msra.mxu0 %v31
  %153 = vmatpush.msra.mxu0 %v30
  %154 = vmatpush.msra.mxu0 %v29
  %155 = vmatpush.msra.mxu0 %v28
  %156 = vmatpush.msra.mxu0 %v27
  %157 = vmatpush.msra.mxu0 %v26
  %158 = vmatpush.msra.mxu0 %v25
  %159 = vmatpush.msra.mxu0 %v24
  %160 = vmatpush.msra.mxu0 %v23
  %161 = vmatmul.f32.gmra.mxu0 %v125
  %v162 = vpop.f32.mrf.mxu0
  %v163 = vadd.f32 0.0, %v162
  %164 = vmatmul.f32.gmra.mxu0 %v127
  %v165 = vpop.f32.mrf.mxu0
  %v166 = vadd.f32 0.0, %v165
  %167 = vmatmul.f32.gmra.mxu0 %v129
  %v168 = vpop.f32.mrf.mxu0
  %v169 = vadd.f32 0.0, %v168
  %170 = vmatmul.f32.gmra.mxu0 %v131
  %v171 = vpop.f32.mrf.mxu0
  %v172 = vadd.f32 0.0, %v171
  %173 = vdwg.mxu0
  %174 = vmatpush.msra.mxu0 0.0
  %175 = vmatpush.msra.mxu0 0.0
  %176 = vmatpush.msra.mxu0 0.0
  %177 = vmatpush.msra.mxu0 0.0
  %178 = vmatpush.msra.mxu0 0.0
  %179 = vmatpush.msra.mxu0 0.0
  %180 = vmatpush.msra.mxu0 0.0
  %181 = vmatpush.msra.mxu0 0.0
  %182 = vmatpush.msra.mxu0 0.0
  %183 = vmatpush.msra.mxu0 0.0
  %184 = vmatpush.msra.mxu0 0.0
  %185 = vmatpush.msra.mxu0 0.0
  %186 = vmatpush.msra.mxu0 0.0
  %187 = vmatpush.msra.mxu0 %v65
  %188 = vmatpush.msra.mxu0 %v40
  %189 = vmatpush.msra.mxu0 %v39
  %190 = vmatmul.f32.gmra.mxu0 %v134
  %v191 = vpop.f32.mrf.mxu0
  %v192 = vadd.f32 %v163, %v191
  %193 = vmatmul.f32.gmra.mxu0 %v137
  %v194 = vpop.f32.mrf.mxu0
  %v195 = vadd.f32 %v166, %v194
  %196 = vmatmul.f32.gmra.mxu0 %v140
  %v197 = vpop.f32.mrf.mxu0
  %v198 = vadd.f32 %v169, %v197
  %199 = vmatmul.f32.gmra.mxu0 %v143
  %v200 = vpop.f32.mrf.mxu0
  %v201 = vadd.f32 %v172, %v200
  %202 = vdwg.mxu0
  %v203 = vmax.f32 %v114, %v192
  %v204 = vmax.f32 %v117, %v195
  %v205 = vmax.f32 %v120, %v198
  %v206 = vmax.f32 %v123, %v201
  %v207 = vld [vmem:[%s2] sm:$0xff]
  %v208 = vld [vmem:[%s2 + $0x8] sm:$0xff]
  %v209 = vld [vmem:[%s2 + $0x10] sm:$0xff]
  %v210 = vld [vmem:[%s2 + $0x18] sm:$0xff]
  %v211 = vld [vmem:[%s2 + $0x20] sm:$0xff]
  %v212 = vld [vmem:[%s2 + $0x28] sm:$0xff]
  %v213 = vld [vmem:[%s2 + $0x30] sm:$0xff]
  %v214 = vld [vmem:[%s2 + $0x38] sm:$0xff]
  %v216 = vsel %vm50, %v208, 0
  %v219 = vsel %vm50, %v210, 0
  %v222 = vsel %vm50, %v212, 0
  %v225 = vsel %vm50, %v214, 0
  %227 = vmatpush.msra.mxu0 %v38
  %228 = vmatpush.msra.mxu0 %v37
  %229 = vmatpush.msra.mxu0 %v36
  %230 = vmatpush.msra.mxu0 %v35
  %231 = vmatpush.msra.mxu0 %v34
  %232 = vmatpush.msra.mxu0 %v33
  %233 = vmatpush.msra.mxu0 %v32
  %234 = vmatpush.msra.mxu0 %v31
  %235 = vmatpush.msra.mxu0 %v30
  %236 = vmatpush.msra.mxu0 %v29
  %237 = vmatpush.msra.mxu0 %v28
  %238 = vmatpush.msra.mxu0 %v27
  %239 = vmatpush.msra.mxu0 %v26
  %240 = vmatpush.msra.mxu0 %v25
  %241 = vmatpush.msra.mxu0 %v24
  %242 = vmatpush.msra.mxu0 %v23
  %243 = vmatmul.f32.gmra.mxu0 %v207
  %v244 = vpop.f32.mrf.mxu0
  %v245 = vadd.f32 0.0, %v244
  %246 = vmatmul.f32.gmra.mxu0 %v209
  %v247 = vpop.f32.mrf.mxu0
  %v248 = vadd.f32 0.0, %v247
  %249 = vmatmul.f32.gmra.mxu0 %v211
  %v250 = vpop.f32.mrf.mxu0
  %v251 = vadd.f32 0.0, %v250
  %252 = vmatmul.f32.gmra.mxu0 %v213
  %v253 = vpop.f32.mrf.mxu0
  %v254 = vadd.f32 0.0, %v253
  %255 = vdwg.mxu0
  %256 = vmatpush.msra.mxu0 0.0
  %257 = vmatpush.msra.mxu0 0.0
  %258 = vmatpush.msra.mxu0 0.0
  %259 = vmatpush.msra.mxu0 0.0
  %260 = vmatpush.msra.mxu0 0.0
  %261 = vmatpush.msra.mxu0 0.0
  %262 = vmatpush.msra.mxu0 0.0
  %263 = vmatpush.msra.mxu0 0.0
  %264 = vmatpush.msra.mxu0 0.0
  %265 = vmatpush.msra.mxu0 0.0
  %266 = vmatpush.msra.mxu0 0.0
  %267 = vmatpush.msra.mxu0 0.0
  %268 = vmatpush.msra.mxu0 0.0
  %269 = vmatpush.msra.mxu0 %v65
  %270 = vmatpush.msra.mxu0 %v40
  %271 = vmatpush.msra.mxu0 %v39
  %272 = vmatmul.f32.gmra.mxu0 %v216
  %v273 = vpop.f32.mrf.mxu0
  %v274 = vadd.f32 %v245, %v273
  %275 = vmatmul.f32.gmra.mxu0 %v219
  %v276 = vpop.f32.mrf.mxu0
  %v277 = vadd.f32 %v248, %v276
  %278 = vmatmul.f32.gmra.mxu0 %v222
  %v279 = vpop.f32.mrf.mxu0
  %v280 = vadd.f32 %v251, %v279
  %281 = vmatmul.f32.gmra.mxu0 %v225
  %v282 = vpop.f32.mrf.mxu0
  %v283 = vadd.f32 %v254, %v282
  %284 = vdwg.mxu0
  %v285 = vmax.f32 %v203, %v274
  %v286 = vmax.f32 %v204, %v277
  %v287 = vmax.f32 %v205, %v280
  %v288 = vmax.f32 %v206, %v283
  %v289 = vld [vmem:[%s3] sm:$0xff]
  %v290 = vld [vmem:[%s3 + $0x8] sm:$0xff]
  %v291 = vld [vmem:[%s3 + $0x10] sm:$0xff]
  %v292 = vld [vmem:[%s3 + $0x18] sm:$0xff]
  %v293 = vld [vmem:[%s3 + $0x20] sm:$0xff]
  %v294 = vld [vmem:[%s3 + $0x28] sm:$0xff]
  %v295 = vld [vmem:[%s3 + $0x30] sm:$0xff]
  %v296 = vld [vmem:[%s3 + $0x38] sm:$0xff]
  %v298 = vsel %vm50, %v290, 0
  %v301 = vsel %vm50, %v292, 0
  %v304 = vsel %vm50, %v294, 0
  %v307 = vsel %vm50, %v296, 0
  %309 = vmatpush.msra.mxu0 %v38
  %310 = vmatpush.msra.mxu0 %v37
  %311 = vmatpush.msra.mxu0 %v36
  %312 = vmatpush.msra.mxu0 %v35
  %313 = vmatpush.msra.mxu0 %v34
  %314 = vmatpush.msra.mxu0 %v33
  %315 = vmatpush.msra.mxu0 %v32
  %316 = vmatpush.msra.mxu0 %v31
  %317 = vmatpush.msra.mxu0 %v30
  %318 = vmatpush.msra.mxu0 %v29
  %319 = vmatpush.msra.mxu0 %v28
  %320 = vmatpush.msra.mxu0 %v27
  %321 = vmatpush.msra.mxu0 %v26
  %322 = vmatpush.msra.mxu0 %v25
  %323 = vmatpush.msra.mxu0 %v24
  %324 = vmatpush.msra.mxu0 %v23
  %325 = vmatmul.f32.gmra.mxu0 %v289
  %v326 = vpop.f32.mrf.mxu0
  %v327 = vadd.f32 0.0, %v326
  %328 = vmatmul.f32.gmra.mxu0 %v291
  %v329 = vpop.f32.mrf.mxu0
  %v330 = vadd.f32 0.0, %v329
  %331 = vmatmul.f32.gmra.mxu0 %v293
  %v332 = vpop.f32.mrf.mxu0
  %v333 = vadd.f32 0.0, %v332
  %334 = vmatmul.f32.gmra.mxu0 %v295
  %v335 = vpop.f32.mrf.mxu0
  %v336 = vadd.f32 0.0, %v335
  %337 = vdwg.mxu0
  %338 = vmatpush.msra.mxu0 0.0
  %339 = vmatpush.msra.mxu0 0.0
  %340 = vmatpush.msra.mxu0 0.0
  %341 = vmatpush.msra.mxu0 0.0
  %342 = vmatpush.msra.mxu0 0.0
  %343 = vmatpush.msra.mxu0 0.0
  %344 = vmatpush.msra.mxu0 0.0
  %345 = vmatpush.msra.mxu0 0.0
  %346 = vmatpush.msra.mxu0 0.0
  %347 = vmatpush.msra.mxu0 0.0
  %348 = vmatpush.msra.mxu0 0.0
  %349 = vmatpush.msra.mxu0 0.0
  %350 = vmatpush.msra.mxu0 0.0
  %351 = vmatpush.msra.mxu0 %v65
  %352 = vmatpush.msra.mxu0 %v40
  %353 = vmatpush.msra.mxu0 %v39
  %354 = vmatmul.f32.gmra.mxu0 %v298
  %v355 = vpop.f32.mrf.mxu0
  %v356 = vadd.f32 %v327, %v355
  %357 = vmatmul.f32.gmra.mxu0 %v301
  %v358 = vpop.f32.mrf.mxu0
  %v359 = vadd.f32 %v330, %v358
  %360 = vmatmul.f32.gmra.mxu0 %v304
  %v361 = vpop.f32.mrf.mxu0
  %v362 = vadd.f32 %v333, %v361
  %363 = vmatmul.f32.gmra.mxu0 %v307
  %v364 = vpop.f32.mrf.mxu0
  %v365 = vadd.f32 %v336, %v364
  %366 = vdwg.mxu0
  %v367 = vmax.f32 %v285, %v356
  %v368 = vmax.f32 %v286, %v359
  %v369 = vmax.f32 %v287, %v362
  %v370 = vmax.f32 %v288, %v365
  %v371 = vld [vmem:[%s5] sm:$0x1]
  %v373 = vperm.slane %v371, 0
  %v375 = vadd.f32 %v367, %v373
  %v376 = vadd.f32 %v368, %v373
  %v377 = vadd.f32 %v369, %v373
  %v378 = vadd.f32 %v370, %v373
  %v379 = vxor.u32 %v375, 2147483648
  %v380 = vxor.u32 %v376, 2147483648
  %v381 = vxor.u32 %v377, 2147483648
  %v382 = vxor.u32 %v378, 2147483648
  %v383 = vmul.f32 %v379, 1.442695
  %v384 = vpow.pop %v383
  %v385 = vmul.f32 %v380, 1.442695
  %v386 = vpow.pop %v385
  %v387 = vmul.f32 %v381, 1.442695
  %v388 = vpow.pop %v387
  %v389 = vmul.f32 %v382, 1.442695
  %v390 = vpow.pop %v389
  %v391 = vadd.f32 %v384, 1.0
  %v392 = vadd.f32 %v386, 1.0
  %v393 = vadd.f32 %v388, 1.0
  %v394 = vadd.f32 %v390, 1.0
  %v395 = vrcp.pop %v391
  %v396 = vmul.f32 %v391, %v395
  %v397 = vsub.f32 1.0, %v396
  %v398 = vmul.f32 %v395, %v397
  %v399 = vadd.f32 %v395, %v398
  %vm400 = vweird.f32 %v391
  %vm401 = vweird.f32 %v395
  %vm402 = vmor %vm400, %vm401
  %v403 = vsel %vm402, %v395, %v399
  %v404 = vand.u32 2147483647, %v391
  %vm405 = vcmp.eq.f32.partialorder %v404, 8.507059e+37
  %v406 = vand.u32 %v391, 2147483648
  %v407 = vor.u32 1.1754944e-38, %v406
  %v408 = vsel %vm405, %v407, %v403
  %v409 = vmul.f32 1.0, %v408
  %v410 = vrcp.pop %v392
  %v411 = vmul.f32 %v392, %v410
  %v412 = vsub.f32 1.0, %v411
  %v413 = vmul.f32 %v410, %v412
  %v414 = vadd.f32 %v410, %v413
  %vm415 = vweird.f32 %v392
  %vm416 = vweird.f32 %v410
  %vm417 = vmor %vm415, %vm416
  %v418 = vsel %vm417, %v410, %v414
  %v419 = vand.u32 2147483647, %v392
  %vm420 = vcmp.eq.f32.partialorder %v419, 8.507059e+37
  %v421 = vand.u32 %v392, 2147483648
  %v422 = vor.u32 1.1754944e-38, %v421
  %v423 = vsel %vm420, %v422, %v418
  %v424 = vmul.f32 1.0, %v423
  %v425 = vrcp.pop %v393
  %v426 = vmul.f32 %v393, %v425
  %v427 = vsub.f32 1.0, %v426
  %v428 = vmul.f32 %v425, %v427
  %v429 = vadd.f32 %v425, %v428
  %vm430 = vweird.f32 %v393
  %vm431 = vweird.f32 %v425
  %vm432 = vmor %vm430, %vm431
  %v433 = vsel %vm432, %v425, %v429
  %v434 = vand.u32 2147483647, %v393
  %vm435 = vcmp.eq.f32.partialorder %v434, 8.507059e+37
  %v436 = vand.u32 %v393, 2147483648
  %v437 = vor.u32 1.1754944e-38, %v436
  %v438 = vsel %vm435, %v437, %v433
  %v439 = vmul.f32 1.0, %v438
  %v440 = vrcp.pop %v394
  %v441 = vmul.f32 %v394, %v440
  %v442 = vsub.f32 1.0, %v441
  %v443 = vmul.f32 %v440, %v442
  %v444 = vadd.f32 %v440, %v443
  %vm445 = vweird.f32 %v394
  %vm446 = vweird.f32 %v440
  %vm447 = vmor %vm445, %vm446
  %v448 = vsel %vm447, %v440, %v444
  %v449 = vand.u32 2147483647, %v394
  %vm450 = vcmp.eq.f32.partialorder %v449, 8.507059e+37
  %v451 = vand.u32 %v394, 2147483648
  %v452 = vor.u32 1.1754944e-38, %v451
  %v453 = vsel %vm450, %v452, %v448
  %v454 = vmul.f32 1.0, %v453
  %vm455 = vcmask 130048
  %456 = vst.msk [vmem:[%s6] sm:$0xff] %vm455, %v409
  %457 = vst.msk [vmem:[%s6 + $0x8] sm:$0xff] %vm455, %v424
  %458 = vst.msk [vmem:[%s6 + $0x10] sm:$0xff] %vm455, %v439
  %459 = vst.msk [vmem:[%s6 + $0x18] sm:$0xff] %vm455, %v454
  // Predicated region
  $region26: #{lenet_forward.4} parent=0 // pred_check
    _
  $region27: #{lenet_forward.4} parent=0 // pred_check_branch
    %461 = sbr.rel (0) target = $region29
  $region28: #{lenet_forward.4} parent=0 // pred_region
    _
  $region29: #{lenet_forward.4} parent=0 // pred_fallthru
    _
  // Predicated region
  $region30: #{lenet_forward.4} parent=0 // pred_check
    _
  $region31: #{lenet_forward.4} parent=0 // pred_check_branch
    %463 = sbr.rel (0) target = $region33
  $region32: #{lenet_forward.4} parent=0 // pred_region
    _
  $region33: #{lenet_forward.4} parent=0 // pred_fallthru
    _

// kernel: lenet_forward.5
$region0: #{lenet_forward.5}
  #allocation0 [shape = 'u32[]', space=smem, size = 0x4, offset = 0x4, fixed_abs, tag = 'smem constant byte address 0x4 - core index']
  #allocation1 [shape = 'u32[72,128]{1,0:T(1,128)}', space=vmem, size = 0x9000, scoped, tag = 'internal scratch']
  %s0 = inlined_call_operand.vmem [shape: f32[2,256], index: 0, kind: input, shape index: {}]
  %s1 = inlined_call_operand.vmem [shape: f32[256,120], index: 1, kind: input, shape index: {}]
  %s2 = inlined_call_operand.vmem [shape: f32[1,120], index: 2, kind: input, shape index: {}]
  %s3 = inlined_call_operand.vmem [shape: f32[120,84], index: 3, kind: input, shape index: {}]
  %s4 = inlined_call_operand.vmem [shape: f32[1,84], index: 4, kind: input, shape index: {}]
  %s5 = inlined_call_operand.vmem [shape: f32[84,10], index: 5, kind: input, shape index: {}]
  %s6 = inlined_call_operand.vmem [shape: f32[1,10], index: 6, kind: input, shape index: {}]
  %s7 = inlined_call_operand.hbm [shape: f32[2,10], index: 7, kind: output, shape index: {}]
  %s8 = sld [smem:[#allocation0]]
  $region38: #{lenet_forward.5} parent=0
    _
  %s10 = ssub.s32 1, %s8
  %s11 = scalar_select 0, %s10, %s8
  $region1: #{lenet_forward.5} parent=0
    #allocation2 [shape = 'u8[1024]{0}', space=vmem, size = 0x400, scoped, tag = 'output window, operand 0, single buffered']
    #allocation3 [shape = 's32[1]{0}', space=sflag, size = 0x4, scoped, tag = 'scoped memory for lenet_forward.5']
    %12 = vsyncpa [#allocation3], 0
    // Predicated region
    $region2: #{lenet_forward.5} parent=1 // pred_check
      _
    $region3: #{lenet_forward.5} parent=1 // pred_check_branch
      %14 = sbr.rel (0) target = $region5
    $region4: #{lenet_forward.5} parent=1 // pred_region
      _
    $region5: #{lenet_forward.5} parent=1 // pred_fallthru
      _
    // Predicated region
    $region6: #{lenet_forward.5} parent=1 // pred_check
      _
    $region7: #{lenet_forward.5} parent=1 // pred_check_branch
      %16 = sbr.rel (0) target = $region9
    $region8: #{lenet_forward.5} parent=1 // pred_region
      _
    $region9: #{lenet_forward.5} parent=1 // pred_fallthru
      _
    // Predicated region
    $region10: #{lenet_forward.5} parent=1 // pred_check
      _
    $region11: #{lenet_forward.5} parent=1 // pred_check_branch
      %18 = sbr.rel (0) target = $region13
    $region12: #{lenet_forward.5} parent=1 // pred_region
      _
    $region13: #{lenet_forward.5} parent=1 // pred_fallthru
      _
    // Predicated region
    $region14: #{lenet_forward.5} parent=1 // pred_check
      _
    $region15: #{lenet_forward.5} parent=1 // pred_check_branch
      %20 = sbr.rel (0) target = $region17
    $region16: #{lenet_forward.5} parent=1 // pred_region
      _
    $region17: #{lenet_forward.5} parent=1 // pred_fallthru
      _
    // Predicated region
    $region18: #{lenet_forward.5} parent=1 // pred_check
      _
    $region19: #{lenet_forward.5} parent=1 // pred_check_branch
      %22 = sbr.rel (0) target = $region21
    $region20: #{lenet_forward.5} parent=1 // pred_region
      _
    $region21: #{lenet_forward.5} parent=1 // pred_fallthru
      _
    // Predicated region
    $region22: #{lenet_forward.5} parent=1 // pred_check
      _
    $region23: #{lenet_forward.5} parent=1 // pred_check_branch
      %24 = sbr.rel (0) target = $region25
    $region24: #{lenet_forward.5} parent=1 // pred_region
      _
    $region25: #{lenet_forward.5} parent=1 // pred_fallthru
      _
    // Predicated region
    $region26: #{lenet_forward.5} parent=1 // pred_check
      _
    $region27: #{lenet_forward.5} parent=1 // pred_check_branch
      %26 = sbr.rel (0) target = $region29
    $region28: #{lenet_forward.5} parent=1 // pred_region
      _
    $region29: #{lenet_forward.5} parent=1 // pred_fallthru
      _
    %v27 = vld [vmem:[%s0] sm:$0xf]
    %v28 = vld [vmem:[%s1] sm:$0xff]
    %v29 = vld [vmem:[%s1 + $0x8] sm:$0xff]
    %v30 = vld [vmem:[%s1 + $0x10] sm:$0xff]
    %v31 = vld [vmem:[%s1 + $0x18] sm:$0xff]
    %v32 = vld [vmem:[%s1 + $0x20] sm:$0xff]
    %v33 = vld [vmem:[%s1 + $0x28] sm:$0xff]
    %v34 = vld [vmem:[%s1 + $0x30] sm:$0xff]
    %v35 = vld [vmem:[%s1 + $0x38] sm:$0xff]
    %v36 = vld [vmem:[%s1 + $0x40] sm:$0xff]
    %v37 = vld [vmem:[%s1 + $0x48] sm:$0xff]
    %v38 = vld [vmem:[%s1 + $0x50] sm:$0xff]
    %v39 = vld [vmem:[%s1 + $0x58] sm:$0xff]
    %v40 = vld [vmem:[%s1 + $0x60] sm:$0xff]
    %v41 = vld [vmem:[%s1 + $0x68] sm:$0xff]
    %v42 = vld [vmem:[%s1 + $0x70] sm:$0xff]
    %v43 = vld [vmem:[%s1 + $0x78] sm:$0xff]
    %v44 = vld [vmem:[%s1 + $0x80] sm:$0xff]
    %v45 = vld [vmem:[%s1 + $0x88] sm:$0xff]
    %v46 = vld [vmem:[%s1 + $0x90] sm:$0xff]
    %v47 = vld [vmem:[%s1 + $0x98] sm:$0xff]
    %v48 = vld [vmem:[%s1 + $0xa0] sm:$0xff]
    %v49 = vld [vmem:[%s1 + $0xa8] sm:$0xff]
    %v50 = vld [vmem:[%s1 + $0xb0] sm:$0xff]
    %v51 = vld [vmem:[%s1 + $0xb8] sm:$0xff]
    %v52 = vld [vmem:[%s1 + $0xc0] sm:$0xff]
    %v53 = vld [vmem:[%s1 + $0xc8] sm:$0xff]
    %v54 = vld [vmem:[%s1 + $0xd0] sm:$0xff]
    %v55 = vld [vmem:[%s1 + $0xd8] sm:$0xff]
    %v56 = vld [vmem:[%s1 + $0xe0] sm:$0xff]
    %v57 = vld [vmem:[%s1 + $0xe8] sm:$0xff]
    %v58 = vld [vmem:[%s1 + $0xf0] sm:$0xff]
    %v59 = vld [vmem:[%s1 + $0xf8] sm:$0xff]
    %v60 = vld [vmem:[%s2] sm:$0x1]
    %v62 = vperm.slane %v60, 0
    %65 = vst [vmem:[#allocation1] ss:$4 sm:$0xff] %v27
    %v66 = vld.sshfl [vmem:[#allocation1] sm:$0xff pattern:$0x73625140]
    %v67 = vld.sshfl [vmem:[#allocation1 + $0x8] sm:$0xff pattern:$0x73625140]
    %70 = vmatpush.msra.mxu0 %v43
    %71 = vmatpush.msra.mxu0 %v42
    %72 = vmatpush.msra.mxu0 %v41
    %73 = vmatpush.msra.mxu0 %v40
    %74 = vmatpush.msra.mxu0 %v39
    %75 = vmatpush.msra.mxu0 %v38
    %76 = vmatpush.msra.mxu0 %v37
    %77 = vmatpush.msra.mxu0 %v36
    %78 = vmatpush.msra.mxu0 %v35
    %79 = vmatpush.msra.mxu0 %v34
    %80 = vmatpush.msra.mxu0 %v33
    %81 = vmatpush.msra.mxu0 %v32
    %82 = vmatpush.msra.mxu0 %v31
    %83 = vmatpush.msra.mxu0 %v30
    %84 = vmatpush.msra.mxu0 %v29
    %85 = vmatpush.msra.mxu0 %v28
    %86 = vmatmul.f32.gmra.mxu0 %v66
    %v87 = vpop.f32.mrf.mxu0
    %v88 = vadd.f32 %v62, %v87
    %89 = vdwg.mxu0
    %90 = vmatpush.msra.mxu0 %v59
    %91 = vmatpush.msra.mxu0 %v58
    %92 = vmatpush.msra.mxu0 %v57
    %93 = vmatpush.msra.mxu0 %v56
    %94 = vmatpush.msra.mxu0 %v55
    %95 = vmatpush.msra.mxu0 %v54
    %96 = vmatpush.msra.mxu0 %v53
    %97 = vmatpush.msra.mxu0 %v52
    %98 = vmatpush.msra.mxu0 %v51
    %99 = vmatpush.msra.mxu0 %v50
    %100 = vmatpush.msra.mxu0 %v49
    %101 = vmatpush.msra.mxu0 %v48
    %102 = vmatpush.msra.mxu0 %v47
    %103 = vmatpush.msra.mxu0 %v46
    %104 = vmatpush.msra.mxu0 %v45
    %105 = vmatpush.msra.mxu0 %v44
    %106 = vmatmul.f32.gmra.mxu0 %v67
    %v107 = vpop.f32.mrf.mxu0
    %v108 = vadd.f32 %v88, %v107
    %109 = vdwg.mxu0
    %v110 = vxor.u32 %v108, 2147483648
    %v111 = vmul.f32 %v110, 1.442695
    %v112 = vpow.pop %v111
    %v113 = vadd.f32 %v112, 1.0
    %v114 = vrcp.pop %v113
    %v115 = vmul.f32 %v113, %v114
    %v116 = vsub.f32 1.0, %v115
    %v117 = vmul.f32 %v114, %v116
    %v118 = vadd.f32 %v114, %v117
    %vm119 = vweird.f32 %v113
    %vm120 = vweird.f32 %v114
    %vm121 = vmor %vm119, %vm120
    %v122 = vsel %vm121, %v114, %v118
    %v123 = vand.u32 2147483647, %v113
    %vm124 = vcmp.eq.f32.partialorder %v123, 8.507059e+37
    %v125 = vand.u32 %v113, 2147483648
    %v126 = vor.u32 1.1754944e-38, %v125
    %v127 = vsel %vm124, %v126, %v122
    %v128 = vmul.f32 1.0, %v127
    %v129 = vld [vmem:[%s3] sm:$0xff]
    %v130 = vld [vmem:[%s3 + $0x8] sm:$0xff]
    %v131 = vld [vmem:[%s3 + $0x10] sm:$0xff]
    %v132 = vld [vmem:[%s3 + $0x18] sm:$0xff]
    %v133 = vld [vmem:[%s3 + $0x20] sm:$0xff]
    %v134 = vld [vmem:[%s3 + $0x28] sm:$0xff]
    %v135 = vld [vmem:[%s3 + $0x30] sm:$0xff]
    %v136 = vld [vmem:[%s3 + $0x38] sm:$0xff]
    %v137 = vld [vmem:[%s3 + $0x40] sm:$0xff]
    %v138 = vld [vmem:[%s3 + $0x48] sm:$0xff]
    %v139 = vld [vmem:[%s3 + $0x50] sm:$0xff]
    %v140 = vld [vmem:[%s3 + $0x58] sm:$0xff]
    %v141 = vld [vmem:[%s3 + $0x60] sm:$0xff]
    %v142 = vld [vmem:[%s3 + $0x68] sm:$0xff]
    %v143 = vld [vmem:[%s3 + $0x70] sm:$0xff]
    %v144 = vld [vmem:[%s4] sm:$0x1]
    %v146 = vperm.slane %v144, 0
    %vm148 = vcmask 982016
    %v150 = vsel %vm148, %v128, 0
    %152 = vmatpush.msra.mxu0 0.0
    %153 = vmatpush.msra.mxu0 %v143
    %154 = vmatpush.msra.mxu0 %v142
    %155 = vmatpush.msra.mxu0 %v141
    %156 = vmatpush.msra.mxu0 %v140
    %157 = vmatpush.msra.mxu0 %v139
    %158 = vmatpush.msra.mxu0 %v138
    %159 = vmatpush.msra.mxu0 %v137
    %160 = vmatpush.msra.mxu0 %v136
    %161 = vmatpush.msra.mxu0 %v135
    %162 = vmatpush.msra.mxu0 %v134
    %163 = vmatpush.msra.mxu0 %v133
    %164 = vmatpush.msra.mxu0 %v132
    %165 = vmatpush.msra.mxu0 %v131
    %166 = vmatpush.msra.mxu0 %v130
    %167 = vmatpush.msra.mxu0 %v129
    %168 = vmatmul.f32.gmra.mxu0 %v150
    %v169 = vpop.f32.mrf.mxu0
    %v170 = vadd.f32 %v146, %v169
    %171 = vdwg.mxu0
    %v172 = vxor.u32 %v170, 2147483648
    %v173 = vmul.f32 %v172, 1.442695
    %v174 = vpow.pop %v173
    %v175 = vadd.f32 %v174, 1.0
    %v176 = vrcp.pop %v175
    %v177 = vmul.f32 %v175, %v176
    %v178 = vsub.f32 1.0, %v177
    %v179 = vmul.f32 %v176, %v178
    %v180 = vadd.f32 %v176, %v179
    %vm181 = vweird.f32 %v175
    %vm182 = vweird.f32 %v176
    %vm183 = vmor %vm181, %vm182
    %v184 = vsel %vm183, %v176, %v180
    %v185 = vand.u32 2147483647, %v175
    %vm186 = vcmp.eq.f32.partialorder %v185, 8.507059e+37
    %v187 = vand.u32 %v175, 2147483648
    %v188 = vor.u32 1.1754944e-38, %v187
    %v189 = vsel %vm186, %v188, %v184
    %v190 = vmul.f32 1.0, %v189
    %v191 = vld [vmem:[%s5] sm:$0xff]
    %v192 = vld [vmem:[%s5 + $0x8] sm:$0xff]
    %v193 = vld [vmem:[%s5 + $0x10] sm:$0xff]
    %v194 = vld [vmem:[%s5 + $0x18] sm:$0xff]
    %v195 = vld [vmem:[%s5 + $0x20] sm:$0xff]
    %v196 = vld [vmem:[%s5 + $0x28] sm:$0xff]
    %v197 = vld [vmem:[%s5 + $0x30] sm:$0xff]
    %v198 = vld [vmem:[%s5 + $0x38] sm:$0xff]
    %v199 = vld [vmem:[%s5 + $0x40] sm:$0xff]
    %v200 = vld [vmem:[%s5 + $0x48] sm:$0xff]
    %v201 = vld [vmem:[%s5 + $0x50] sm:$0xf]
    %v202 = vld [vmem:[%s6] sm:$0x1]
    %v204 = vperm.slane %v202, 0
    %vm206 = vcmask 687104
    %v208 = vsel %vm206, %v190, 0
    %vm210 = vcmask 1043456
    %v212 = vsel %vm210, %v201, 0
    %214 = vmatpush.msra.mxu0 0.0
    %215 = vmatpush.msra.mxu0 0.0
    %216 = vmatpush.msra.mxu0 0.0
    %217 = vmatpush.msra.mxu0 0.0
    %218 = vmatpush.msra.mxu0 0.0
    %219 = vmatpush.msra.mxu0 %v212
    %220 = vmatpush.msra.mxu0 %v200
    %221 = vmatpush.msra.mxu0 %v199
    %222 = vmatpush.msra.mxu0 %v198
    %223 = vmatpush.msra.mxu0 %v197
    %224 = vmatpush.msra.mxu0 %v196
    %225 = vmatpush.msra.mxu0 %v195
    %226 = vmatpush.msra.mxu0 %v194
    %227 = vmatpush.msra.mxu0 %v193
    %228 = vmatpush.msra.mxu0 %v192
    %229 = vmatpush.msra.mxu0 %v191
    %230 = vmatmul.f32.gmra.mxu0 %v208
    %v231 = vpop.f32.mrf.mxu0
    %v232 = vadd.f32 %v204, %v231
    %233 = vdwg.mxu0
    %vm234 = vcmask 74752
    %235 = vst.msk [vmem:[#allocation2] sm:$0x3] %vm234, %v232
    // Predicated region
    $region30: #{lenet_forward.5} parent=1 // pred_check
      _
    $region31: #{lenet_forward.5} parent=1 // pred_check_branch
      %237 = sbr.rel (0) target = $region33
    $region32: #{lenet_forward.5} parent=1 // pred_region
      %239 = vsyncadd [#allocation3], 0
      %s241 = sshll.u32 [#allocation2], 4
      %s242 = int_to_ptr.vmem [resolvable:$true] %s241
      %s243 = sshll.u32 %s7, 4
      %s244 = int_to_ptr.hbm [resolvable:$true] %s243
      %246 = dma.vmem_to_hbm [thread:$0]  %s242, 32, %s244, [#allocation3]
    $region33: #{lenet_forward.5} parent=1 // pred_fallthru
      _
    // Predicated region
    $region34: #{lenet_forward.5} parent=1 // pred_check
      _
    $region35: #{lenet_forward.5} parent=1 // pred_check_branch
      %248 = sbr.rel (0) target = $region37
    $region36: #{lenet_forward.5} parent=1 // pred_region
      %250 = dma.done [#allocation3], 32
    $region37: #{lenet_forward.5} parent=1 // pred_fallthru
      _
    %251 = vsyncpa [#allocation3], 1

</llo_original>
